<compile_context>
chip_gen: v7x
topology: tpu7x:2x2x1
jax: 0.10.0
libtpu: 0.0.40
codegen_flags: <defaults>
</compile_context>

<pallas_src>
import functools
import math

import jax
import jax.numpy as jnp
from jax import lax
from jax.experimental import pallas as pl
from jax.experimental.pallas import tpu as pltpu

_NEG_INF = -1e30  # additive causal-mask constant (f32-safe; overflows bf16)


def mha_flash_kernel(xq_ref, xk_ref, wqkv_ref, wp_ref, bp_ref, o_ref,
                     q_scr, m_scr, l_scr, acc_scr,
                     *, n_head, head_size, tq, tk):
    E = n_head * head_size
    qi = pl.program_id(1)
    ki = pl.program_id(2)
    scale = 1.0 / math.sqrt(head_size)

    @pl.when(ki == 0)
    def _init():
        # Project Q once per (batch, query block), fused over heads; fold in the
        # 1/sqrt(hs) scale here (T*hs mults instead of T*T on the scores).
        q = jnp.dot(xq_ref[...], wqkv_ref[:, 0:E],
                    preferred_element_type=jnp.float32)
        q_scr[...] = (q * scale).astype(q_scr.dtype)
        m_scr[...] = jnp.full_like(m_scr, -jnp.inf)
        l_scr[...] = jnp.zeros_like(l_scr)
        acc_scr[...] = jnp.zeros_like(acc_scr)

    # Skip KV tiles that lie entirely in the causal future of this query block.
    @pl.when(ki * tk <= qi * tq + (tq - 1))
    def _compute():
        # Project K and V for this KV tile, fused across heads and across K/V.
        kv = jnp.dot(xk_ref[...], wqkv_ref[:, E:3 * E],
                     preferred_element_type=jnp.float32).astype(jnp.bfloat16)

        # Additive causal-mask bias, computed once per step, shared by all heads.
        q_pos = qi * tq + lax.broadcasted_iota(jnp.int32, (tq, tk), 0)
        k_pos = ki * tk + lax.broadcasted_iota(jnp.int32, (tq, tk), 1)
        mask_bias = jnp.where(k_pos <= q_pos, 0.0, _NEG_INF).astype(jnp.float32)

        for h in range(n_head):  # static unroll over heads (small n_head)
            sl = slice(h * head_size, (h + 1) * head_size)
            q_h = q_scr[:, sl]                                  # (tq, hs) bf16
            k_h = kv[:, sl]                                     # (tk, hs) bf16
            v_h = kv[:, E + h * head_size:E + (h + 1) * head_size]

            # s = (q * scale) @ k^T  (contraction over hs, no explicit transpose)
            s = lax.dot_general(q_h, k_h, (((1,), (1,)), ((), ())),
                                preferred_element_type=jnp.float32)
            s = s + mask_bias                                   # (tq, tk) f32

            # Online (flash) softmax update, all in f32.
            m_prev = m_scr[h]
            m_new = jnp.maximum(m_prev, jnp.max(s, axis=-1, keepdims=True))
            alpha = jnp.exp(m_prev - m_new)
            p = jnp.exp(s - m_new)
            l_scr[h] = alpha * l_scr[h] + jnp.sum(p, axis=-1, keepdims=True)
            acc_scr[h] = alpha * acc_scr[h] + jnp.dot(
                p.astype(jnp.bfloat16), v_h, preferred_element_type=jnp.float32)
            m_scr[h] = m_new

    @pl.when(ki == pl.num_programs(2) - 1)
    def _finalize():
        # Fold the head concatenation into the output projection:
        #   out = sum_h (ctx_h @ Wp[h]) + b   ==  concat_h(ctx_h) @ Wp + b
        out = jnp.zeros((tq, n_head * head_size), jnp.float32)
        for h in range(n_head):
            inv_l = pl.reciprocal(l_scr[h], approx=True)        # EUP slot, ~free
            ctx_h = (acc_scr[h] * inv_l).astype(jnp.bfloat16)   # (tq, hs)
            out = out + jnp.dot(ctx_h, wp_ref[h],
                                preferred_element_type=jnp.float32)
        o_ref[...] = (out + bp_ref[...]).astype(o_ref.dtype)
        # TODO(synk): attention/output dropout are identity here (eval mode);
        # training-mode stochastic dropout (pltpu.prng_*) is not implemented.


def _pick_tile(total, preferred):
    t = min(total, preferred)
    while total % t:
        t -= 1
    return t


def multi_head_attention(x, wq, wk, wv, wp, bp, *, tq=None, tk=None):
    """nanoGPT MultiHeadAttention forward (eval mode).

    x : (B, T, E); wq/wk/wv : (H, E, hs) per-head weights pre-transposed to
    (in, out); wp : (E, E) output projection in (in, out) layout; bp : (1, E).
    """
    B, T, E = x.shape
    H, _, hs = wq.shape
    assert H * hs == E, "n_head * head_size must equal embed_size"

    # Query / KV tile sizes (whole sequence for small T; bounded for large T so
    # the per-step working set fits v7x's 64 MiB VMEM).
    tq = tq or _pick_tile(T, 256)
    tk = tk or _pick_tile(T, 512)

    # Pack q/k/v weights into one lane-dense (E, 3E) matrix:
    # columns [0,E) -> Q (head-major), [E,2E) -> K, [2E,3E) -> V.
    def cols(w):  # (H, E, hs) -> (E, H*hs)
        return jnp.transpose(w, (1, 0, 2)).reshape(E, E)
    wqkv = jnp.concatenate([cols(wq), cols(wk), cols(wv)], axis=-1)

    # Output projection reshaped so head h's block of rows is wp_r[h] : (hs, E).
    wp_r = wp.reshape(H, hs, E)

    # bf16 operands on the MXU; f32 accumulation / softmax inside the kernel.
    x_bf = x.astype(jnp.bfloat16)
    wqkv = wqkv.astype(jnp.bfloat16)
    wp_r = wp_r.astype(jnp.bfloat16)
    bp_f = bp.astype(jnp.float32)

    grid = (B, T // tq, T // tk)
    kernel = functools.partial(mha_flash_kernel, n_head=H, head_size=hs,
                               tq=tq, tk=tk)

    cost = pl.CostEstimate(
        flops=(2 * B * T * E * 3 * E          # fused QKV projections
               + 4 * B * H * T * T * hs       # scores + p@v (causal upper bound)
               + 2 * B * T * E * E),          # output projection
        transcendentals=B * H * T * T,        # softmax exp
        bytes_accessed=(2 * B * T * E * 2     # x read twice (bf16)
                        + E * 3 * E * 2 + H * hs * E * 2 + E * 4
                        + B * T * E * 4))     # f32 output

    return pl.pallas_call(
        kernel,
        out_shape=jax.ShapeDtypeStruct((B, T, E), x.dtype),
        grid=grid,
        in_specs=[
            # Query-block rows of x.
            pl.BlockSpec((pl.Squeezed(), tq, E), lambda b, qi, ki: (b, qi, 0)),
            # KV-tile rows of x (same array, different tiling).
            pl.BlockSpec((pl.Squeezed(), tk, E), lambda b, qi, ki: (b, ki, 0)),
            pl.BlockSpec((E, 3 * E), lambda b, qi, ki: (0, 0)),   # packed Wqkv
            pl.BlockSpec((H, hs, E), lambda b, qi, ki: (0, 0, 0)),  # Wproj per head
            pl.BlockSpec((1, E), lambda b, qi, ki: (0, 0)),       # bias
        ],
        out_specs=pl.BlockSpec((pl.Squeezed(), tq, E),
                               lambda b, qi, ki: (b, qi, 0)),
        scratch_shapes=[
            pltpu.VMEM((tq, E), jnp.bfloat16),      # scaled Q (per query block)
            pltpu.VMEM((H, tq, 1), jnp.float32),    # running row max
            pltpu.VMEM((H, tq, 1), jnp.float32),    # running denominator
            pltpu.VMEM((H, tq, hs), jnp.float32),   # running context accumulator
        ],
        compiler_params=pltpu.CompilerParams(
            dimension_semantics=("parallel", "parallel", "arbitrary"),
            vmem_limit_bytes=48 * 1024 * 1024),
        cost_estimate=cost,
    )(x_bf, x_bf, wqkv, wp_r, bp_f)


def reference(x, wq, wk, wv, wp, bp):
    """Pure-JAX f32 reference of the same forward pass (eval mode)."""
    B, T, E = x.shape
    H, _, hs = wq.shape
    scale = 1.0 / math.sqrt(hs)
    mask = jnp.tril(jnp.ones((T, T), dtype=bool))
    outs = []
    for h in range(H):
        q = x @ wq[h]
        k = x @ wk[h]
        v = x @ wv[h]
        s = (q @ jnp.swapaxes(k, -1, -2)) * scale
        s = jnp.where(mask, s, _NEG_INF)
        p = jax.nn.softmax(s, axis=-1)
        outs.append(p @ v)
    heads = jnp.concatenate(outs, axis=-1)
    return heads @ wp + bp[0]


if __name__ == "__main__":
    # ModelConfig-equivalent: embed_size=32, n_head=4 (head_size=8),
    # block_size (seq)=8, batch=2; dropout is identity in eval mode.
    B, T, E, H = 2, 8, 32, 4
    hs = E // H

    key = jax.random.PRNGKey(0)
    kx, kq, kk, kv, kp, kb = jax.random.split(key, 6)
    x = jax.random.normal(kx, (B, T, E), dtype=jnp.float32)
    wq = jax.random.normal(kq, (H, E, hs), dtype=jnp.float32) * 0.1
    wk = jax.random.normal(kk, (H, E, hs), dtype=jnp.float32) * 0.1
    wv = jax.random.normal(kv, (H, E, hs), dtype=jnp.float32) * 0.1
    wp = jax.random.normal(kp, (E, E), dtype=jnp.float32) * 0.1
    bp = jax.random.normal(kb, (1, E), dtype=jnp.float32) * 0.1

    out = jax.block_until_ready(multi_head_attention(x, wq, wk, wv, wp, bp))
    ref = jax.block_until_ready(reference(x, wq, wk, wv, wp, bp))

    assert out.shape == (B, T, E)
    # bf16 MXU operands with f32 accumulation -> loosened tolerance vs f32 ref.
    assert jnp.allclose(out, ref, atol=3e-2, rtol=3e-2), "mismatch vs reference"

    print("KERNEL_OK")
</pallas_src>

<mosaic_0001>
module attributes {stable_mosaic.version = 11 : i64} {
  func.func @mha_flash_kernel(%arg0: i32, %arg1: i32, %arg2: i32, %arg3: memref<1x8x32xbf16, #tpu.memory_space<vmem>>, %arg4: memref<1x8x32xbf16, #tpu.memory_space<vmem>>, %arg5: memref<32x96xbf16, #tpu.memory_space<vmem>>, %arg6: memref<4x8x32xbf16, #tpu.memory_space<vmem>>, %arg7: memref<1x32xf32, #tpu.memory_space<vmem>>, %arg8: memref<1x8x32xf32, #tpu.memory_space<vmem>>, %arg9: memref<8x32xbf16, #tpu.memory_space<vmem>>, %arg10: memref<4x8x1xf32, #tpu.memory_space<vmem>>, %arg11: memref<4x8x1xf32, #tpu.memory_space<vmem>>, %arg12: memref<4x8x8xf32, #tpu.memory_space<vmem>>) attributes {dimension_semantics = [#tpu.dimension_semantics<parallel>, #tpu.dimension_semantics<parallel>, #tpu.dimension_semantics<arbitrary>], iteration_bounds = array<i64: 2, 1, 1>, scalar_prefetch = 0 : i64, scratch_operands = 4 : i64, tpu.core_type = #tpu.core_type<tc>, window_params = [{transform_indices = @transform_0, window_bounds = array<i64: 1, 8, 32>}, {transform_indices = @transform_1, window_bounds = array<i64: 1, 8, 32>}, {pipeline_mode = #tpu.pipeline_mode<synchronous>, transform_indices = @transform_2, window_bounds = array<i64: 32, 96>}, {pipeline_mode = #tpu.pipeline_mode<synchronous>, transform_indices = @transform_3, window_bounds = array<i64: 4, 8, 32>}, {pipeline_mode = #tpu.pipeline_mode<synchronous>, transform_indices = @transform_4, window_bounds = array<i64: 1, 32>}, {transform_indices = @transform_5, window_bounds = array<i64: 1, 8, 32>}]} {
    %c0_i32 = arith.constant 0 : i32
    %0 = arith.cmpi eq, %arg2, %c0_i32 : i32
    %1 = arith.extui %0 : i1 to i32
    %c0_i32_0 = arith.constant 0 : i32
    %2 = arith.cmpi ne, %1, %c0_i32_0 : i32
    scf.if %2 {
      %c0 = arith.constant 0 : index
      %c0_5 = arith.constant 0 : index
      %c0_6 = arith.constant 0 : index
      %12 = vector.load %arg3[%c0, %c0_5, %c0_6] : memref<1x8x32xbf16, #tpu.memory_space<vmem>>, vector<1x8x32xbf16>
      %13 = vector.shape_cast %12 : vector<1x8x32xbf16> to vector<8x32xbf16>
      %c0_7 = arith.constant 0 : index
      %c0_8 = arith.constant 0 : index
      %14 = vector.load %arg5[%c0_7, %c0_8] : memref<32x96xbf16, #tpu.memory_space<vmem>>, vector<32x32xbf16>
      %cst = arith.constant dense<0.000000e+00> : vector<8x32xf32>
      %15 = tpu.matmul %13, %14, %cst {dimension_numbers = #tpu.dot_dimension_numbers<[1], [0], [0], [1], [0, 0, 1, 1], [], []>} : vector<8x32xbf16>, vector<32x32xbf16>, vector<8x32xf32> -> vector<8x32xf32>
      %cst_9 = arith.constant 0.353553385 : f32
      %16 = vector.broadcast %cst_9 : f32 to vector<8x32xf32>
      %17 = arith.mulf %15, %16 : vector<8x32xf32>
      %18 = arith.truncf %17 : vector<8x32xf32> to vector<8x32xbf16>
      %c0_10 = arith.constant 0 : index
      %c0_11 = arith.constant 0 : index
      %19 = vector.load %arg9[%c0_10, %c0_11] : memref<8x32xbf16, #tpu.memory_space<vmem>>, vector<8x32xbf16>
      tpu.vector_store %arg9[%c0_10, %c0_11], %18 {strides = array<i32>} : memref<8x32xbf16, #tpu.memory_space<vmem>>, vector<8x32xbf16>,
      %cst_12 = arith.constant 0xFF800000 : f32
      %20 = vector.broadcast %cst_12 : f32 to vector<4x8x1xf32>
      %c0_13 = arith.constant 0 : index
      %c0_14 = arith.constant 0 : index
      %c0_15 = arith.constant 0 : index
      %21 = vector.load %arg10[%c0_13, %c0_14, %c0_15] : memref<4x8x1xf32, #tpu.memory_space<vmem>>, vector<4x8x1xf32>
      tpu.vector_store %arg10[%c0_13, %c0_14, %c0_15], %20 {strides = array<i32>} : memref<4x8x1xf32, #tpu.memory_space<vmem>>, vector<4x8x1xf32>,
      %cst_16 = arith.constant 0.000000e+00 : f32
      %22 = vector.broadcast %cst_16 : f32 to vector<4x8x1xf32>
      %c0_17 = arith.constant 0 : index
      %c0_18 = arith.constant 0 : index
      %c0_19 = arith.constant 0 : index
      %23 = vector.load %arg11[%c0_17, %c0_18, %c0_19] : memref<4x8x1xf32, #tpu.memory_space<vmem>>, vector<4x8x1xf32>
      tpu.vector_store %arg11[%c0_17, %c0_18, %c0_19], %22 {strides = array<i32>} : memref<4x8x1xf32, #tpu.memory_space<vmem>>, vector<4x8x1xf32>,
      %cst_20 = arith.constant 0.000000e+00 : f32
      %24 = vector.broadcast %cst_20 : f32 to vector<4x8x8xf32>
      %c0_21 = arith.constant 0 : index
      %c0_22 = arith.constant 0 : index
      %c0_23 = arith.constant 0 : index
      %25 = vector.load %arg12[%c0_21, %c0_22, %c0_23] : memref<4x8x8xf32, #tpu.memory_space<vmem>>, vector<4x8x8xf32>
      tpu.vector_store %arg12[%c0_21, %c0_22, %c0_23], %24 {strides = array<i32>} : memref<4x8x8xf32, #tpu.memory_space<vmem>>, vector<4x8x8xf32>,
    } else {
    }
    %c8_i32 = arith.constant 8 : i32
    %3 = arith.muli %arg2, %c8_i32 : i32
    %c8_i32_1 = arith.constant 8 : i32
    %4 = arith.muli %arg1, %c8_i32_1 : i32
    %c7_i32 = arith.constant 7 : i32
    %5 = arith.addi %4, %c7_i32 : i32
    %6 = arith.cmpi sle, %3, %5 : i32
    %7 = arith.extui %6 : i1 to i32
    %c0_i32_2 = arith.constant 0 : i32
    %8 = arith.cmpi ne, %7, %c0_i32_2 : i32
    scf.if %8 {
      %c0 = arith.constant 0 : index
      %c0_5 = arith.constant 0 : index
      %c0_6 = arith.constant 0 : index
      %12 = vector.load %arg4[%c0, %c0_5, %c0_6] : memref<1x8x32xbf16, #tpu.memory_space<vmem>>, vector<1x8x32xbf16>
      %13 = vector.shape_cast %12 : vector<1x8x32xbf16> to vector<8x32xbf16>
      %c0_7 = arith.constant 0 : index
      %c32 = arith.constant 32 : index
      %14 = vector.load %arg5[%c0_7, %c32] : memref<32x96xbf16, #tpu.memory_space<vmem>>, vector<32x64xbf16>
      %cst = arith.constant dense<0.000000e+00> : vector<8x64xf32>
      %15 = tpu.matmul %13, %14, %cst {dimension_numbers = #tpu.dot_dimension_numbers<[1], [0], [0], [1], [0, 0, 1, 1], [], []>} : vector<8x32xbf16>, vector<32x64xbf16>, vector<8x64xf32> -> vector<8x64xf32>
      %16 = arith.truncf %15 : vector<8x64xf32> to vector<8x64xbf16>
      %c8_i32_8 = arith.constant 8 : i32
      %17 = arith.muli %arg1, %c8_i32_8 : i32
      %18 = tpu.iota {dimensions = array<i32: 0>} : vector<8x8xi32>
      %19 = vector.broadcast %17 : i32 to vector<8x8xi32>
      %20 = arith.addi %19, %18 : vector<8x8xi32>
      %c8_i32_9 = arith.constant 8 : i32
      %21 = arith.muli %arg2, %c8_i32_9 : i32
      %22 = tpu.iota {dimensions = array<i32: 1>} : vector<8x8xi32>
      %23 = vector.broadcast %21 : i32 to vector<8x8xi32>
      %24 = arith.addi %23, %22 : vector<8x8xi32>
      %25 = arith.cmpi sle, %24, %20 : vector<8x8xi32>
      %cst_10 = arith.constant 0.000000e+00 : f32
      %cst_11 = arith.constant -1.000000e+30 : f32
      %26 = vector.broadcast %cst_10 : f32 to vector<8x8xf32>
      %27 = vector.broadcast %cst_11 : f32 to vector<8x8xf32>
      %28 = arith.select %25, %26, %27 : vector<8x8xi1>, vector<8x8xf32>
      %c0_12 = arith.constant 0 : index
      %c0_13 = arith.constant 0 : index
      %29 = vector.load %arg9[%c0_12, %c0_13] : memref<8x32xbf16, #tpu.memory_space<vmem>>, vector<8x8xbf16>
      %30 = vector.extract_strided_slice %16 {offsets = [0, 0], sizes = [8, 8], strides = [1, 1]} : vector<8x64xbf16> to vector<8x8xbf16>
      %31 = vector.extract_strided_slice %16 {offsets = [0, 32], sizes = [8, 8], strides = [1, 1]} : vector<8x64xbf16> to vector<8x8xbf16>
      %cst_14 = arith.constant dense<0.000000e+00> : vector<8x8xf32>
      %32 = tpu.matmul %29, %30, %cst_14 {dimension_numbers = #tpu.dot_dimension_numbers<[1], [1], [0], [0], [0, 0, 1, 0], [], []>} : vector<8x8xbf16>, vector<8x8xbf16>, vector<8x8xf32> -> vector<8x8xf32>
      %33 = arith.addf %32, %28 : vector<8x8xf32>
      %c0_15 = arith.constant 0 : index
      %c0_16 = arith.constant 0 : index
      %c0_17 = arith.constant 0 : index
      %34 = vector.load %arg10[%c0_15, %c0_16, %c0_17] : memref<4x8x1xf32, #tpu.memory_space<vmem>>, vector<1x8x1xf32>
      %35 = vector.shape_cast %34 : vector<1x8x1xf32> to vector<8x1xf32>
      %cst_18 = arith.constant dense<0xFF800000> : vector<8xf32>
      %36 = vector.multi_reduction <maximumf>, %33, %cst_18 [1] : vector<8x8xf32> to vector<8xf32>
      %37 = vector.shape_cast %36 : vector<8xf32> to vector<8x1xf32>
      %38 = arith.maximumf %35, %37 : vector<8x1xf32>
      %39 = arith.subf %35, %38 : vector<8x1xf32>
      %40 = math.exp %39 : vector<8x1xf32>
      %41 = vector.broadcast %38 : vector<8x1xf32> to vector<8x8xf32>
      %42 = arith.subf %33, %41 : vector<8x8xf32>
      %43 = math.exp %42 : vector<8x8xf32>
      %c0_19 = arith.constant 0 : index
      %c0_20 = arith.constant 0 : index
      %c0_21 = arith.constant 0 : index
      %44 = vector.load %arg11[%c0_19, %c0_20, %c0_21] : memref<4x8x1xf32, #tpu.memory_space<vmem>>, vector<1x8x1xf32>
      %45 = vector.shape_cast %44 : vector<1x8x1xf32> to vector<8x1xf32>
      %46 = arith.mulf %40, %45 : vector<8x1xf32>
      %cst_22 = arith.constant dense<0.000000e+00> : vector<8xf32>
      %47 = vector.multi_reduction <add>, %43, %cst_22 [1] : vector<8x8xf32> to vector<8xf32>
      %48 = vector.shape_cast %47 : vector<8xf32> to vector<8x1xf32>
      %49 = arith.addf %46, %48 : vector<8x1xf32>
      %c0_23 = arith.constant 0 : index
      %c0_24 = arith.constant 0 : index
      %c0_25 = arith.constant 0 : index
      %50 = vector.load %arg11[%c0_23, %c0_24, %c0_25] : memref<4x8x1xf32, #tpu.memory_space<vmem>>, vector<1x8x1xf32>
      %51 = vector.shape_cast %50 : vector<1x8x1xf32> to vector<8x1xf32>
      %52 = vector.shape_cast %49 : vector<8x1xf32> to vector<1x8x1xf32>
      tpu.vector_store %arg11[%c0_23, %c0_24, %c0_25], %52 {strides = array<i32>} : memref<4x8x1xf32, #tpu.memory_space<vmem>>, vector<1x8x1xf32>,
      %c0_26 = arith.constant 0 : index
      %c0_27 = arith.constant 0 : index
      %c0_28 = arith.constant 0 : index
      %53 = vector.load %arg12[%c0_26, %c0_27, %c0_28] : memref<4x8x8xf32, #tpu.memory_space<vmem>>, vector<1x8x8xf32>
      %54 = vector.shape_cast %53 : vector<1x8x8xf32> to vector<8x8xf32>
      %55 = vector.broadcast %40 : vector<8x1xf32> to vector<8x8xf32>
      %56 = arith.mulf %55, %54 : vector<8x8xf32>
      %57 = arith.truncf %43 : vector<8x8xf32> to vector<8x8xbf16>
      %cst_29 = arith.constant dense<0.000000e+00> : vector<8x8xf32>
      %58 = tpu.matmul %57, %31, %cst_29 {dimension_numbers = #tpu.dot_dimension_numbers<[1], [0], [0], [1], [0, 0, 1, 1], [], []>} : vector<8x8xbf16>, vector<8x8xbf16>, vector<8x8xf32> -> vector<8x8xf32>
      %59 = arith.addf %56, %58 : vector<8x8xf32>
      %c0_30 = arith.constant 0 : index
      %c0_31 = arith.constant 0 : index
      %c0_32 = arith.constant 0 : index
      %60 = vector.load %arg12[%c0_30, %c0_31, %c0_32] : memref<4x8x8xf32, #tpu.memory_space<vmem>>, vector<1x8x8xf32>
      %61 = vector.shape_cast %60 : vector<1x8x8xf32> to vector<8x8xf32>
      %62 = vector.shape_cast %59 : vector<8x8xf32> to vector<1x8x8xf32>
      tpu.vector_store %arg12[%c0_30, %c0_31, %c0_32], %62 {strides = array<i32>} : memref<4x8x8xf32, #tpu.memory_space<vmem>>, vector<1x8x8xf32>,
      %c0_33 = arith.constant 0 : index
      %c0_34 = arith.constant 0 : index
      %c0_35 = arith.constant 0 : index
      %63 = vector.load %arg10[%c0_33, %c0_34, %c0_35] : memref<4x8x1xf32, #tpu.memory_space<vmem>>, vector<1x8x1xf32>
      %64 = vector.shape_cast %63 : vector<1x8x1xf32> to vector<8x1xf32>
      %65 = vector.shape_cast %38 : vector<8x1xf32> to vector<1x8x1xf32>
      tpu.vector_store %arg10[%c0_33, %c0_34, %c0_35], %65 {strides = array<i32>} : memref<4x8x1xf32, #tpu.memory_space<vmem>>, vector<1x8x1xf32>,
      %c0_36 = arith.constant 0 : index
      %c8 = arith.constant 8 : index
      %66 = vector.load %arg9[%c0_36, %c8] : memref<8x32xbf16, #tpu.memory_space<vmem>>, vector<8x8xbf16>
      %67 = vector.extract_strided_slice %16 {offsets = [0, 8], sizes = [8, 8], strides = [1, 1]} : vector<8x64xbf16> to vector<8x8xbf16>
      %68 = vector.extract_strided_slice %16 {offsets = [0, 40], sizes = [8, 8], strides = [1, 1]} : vector<8x64xbf16> to vector<8x8xbf16>
      %cst_37 = arith.constant dense<0.000000e+00> : vector<8x8xf32>
      %69 = tpu.matmul %66, %67, %cst_37 {dimension_numbers = #tpu.dot_dimension_numbers<[1], [1], [0], [0], [0, 0, 1, 0], [], []>} : vector<8x8xbf16>, vector<8x8xbf16>, vector<8x8xf32> -> vector<8x8xf32>
      %70 = arith.addf %69, %28 : vector<8x8xf32>
      %c1 = arith.constant 1 : index
      %c0_38 = arith.constant 0 : index
      %c0_39 = arith.constant 0 : index
      %71 = vector.load %arg10[%c1, %c0_38, %c0_39] : memref<4x8x1xf32, #tpu.memory_space<vmem>>, vector<1x8x1xf32>
      %72 = vector.shape_cast %71 : vector<1x8x1xf32> to vector<8x1xf32>
      %cst_40 = arith.constant dense<0xFF800000> : vector<8xf32>
      %73 = vector.multi_reduction <maximumf>, %70, %cst_40 [1] : vector<8x8xf32> to vector<8xf32>
      %74 = vector.shape_cast %73 : vector<8xf32> to vector<8x1xf32>
      %75 = arith.maximumf %72, %74 : vector<8x1xf32>
      %76 = arith.subf %72, %75 : vector<8x1xf32>
      %77 = math.exp %76 : vector<8x1xf32>
      %78 = vector.broadcast %75 : vector<8x1xf32> to vector<8x8xf32>
      %79 = arith.subf %70, %78 : vector<8x8xf32>
      %80 = math.exp %79 : vector<8x8xf32>
      %c1_41 = arith.constant 1 : index
      %c0_42 = arith.constant 0 : index
      %c0_43 = arith.constant 0 : index
      %81 = vector.load %arg11[%c1_41, %c0_42, %c0_43] : memref<4x8x1xf32, #tpu.memory_space<vmem>>, vector<1x8x1xf32>
      %82 = vector.shape_cast %81 : vector<1x8x1xf32> to vector<8x1xf32>
      %83 = arith.mulf %77, %82 : vector<8x1xf32>
      %cst_44 = arith.constant dense<0.000000e+00> : vector<8xf32>
      %84 = vector.multi_reduction <add>, %80, %cst_44 [1] : vector<8x8xf32> to vector<8xf32>
      %85 = vector.shape_cast %84 : vector<8xf32> to vector<8x1xf32>
      %86 = arith.addf %83, %85 : vector<8x1xf32>
      %c1_45 = arith.constant 1 : index
      %c0_46 = arith.constant 0 : index
      %c0_47 = arith.constant 0 : index
      %87 = vector.load %arg11[%c1_45, %c0_46, %c0_47] : memref<4x8x1xf32, #tpu.memory_space<vmem>>, vector<1x8x1xf32>
      %88 = vector.shape_cast %87 : vector<1x8x1xf32> to vector<8x1xf32>
      %89 = vector.shape_cast %86 : vector<8x1xf32> to vector<1x8x1xf32>
      tpu.vector_store %arg11[%c1_45, %c0_46, %c0_47], %89 {strides = array<i32>} : memref<4x8x1xf32, #tpu.memory_space<vmem>>, vector<1x8x1xf32>,
      %c1_48 = arith.constant 1 : index
      %c0_49 = arith.constant 0 : index
      %c0_50 = arith.constant 0 : index
      %90 = vector.load %arg12[%c1_48, %c0_49, %c0_50] : memref<4x8x8xf32, #tpu.memory_space<vmem>>, vector<1x8x8xf32>
      %91 = vector.shape_cast %90 : vector<1x8x8xf32> to vector<8x8xf32>
      %92 = vector.broadcast %77 : vector<8x1xf32> to vector<8x8xf32>
      %93 = arith.mulf %92, %91 : vector<8x8xf32>
      %94 = arith.truncf %80 : vector<8x8xf32> to vector<8x8xbf16>
      %cst_51 = arith.constant dense<0.000000e+00> : vector<8x8xf32>
      %95 = tpu.matmul %94, %68, %cst_51 {dimension_numbers = #tpu.dot_dimension_numbers<[1], [0], [0], [1], [0, 0, 1, 1], [], []>} : vector<8x8xbf16>, vector<8x8xbf16>, vector<8x8xf32> -> vector<8x8xf32>
      %96 = arith.addf %93, %95 : vector<8x8xf32>
      %c1_52 = arith.constant 1 : index
      %c0_53 = arith.constant 0 : index
      %c0_54 = arith.constant 0 : index
      %97 = vector.load %arg12[%c1_52, %c0_53, %c0_54] : memref<4x8x8xf32, #tpu.memory_space<vmem>>, vector<1x8x8xf32>
      %98 = vector.shape_cast %97 : vector<1x8x8xf32> to vector<8x8xf32>
      %99 = vector.shape_cast %96 : vector<8x8xf32> to vector<1x8x8xf32>
      tpu.vector_store %arg12[%c1_52, %c0_53, %c0_54], %99 {strides = array<i32>} : memref<4x8x8xf32, #tpu.memory_space<vmem>>, vector<1x8x8xf32>,
      %c1_55 = arith.constant 1 : index
      %c0_56 = arith.constant 0 : index
      %c0_57 = arith.constant 0 : index
      %100 = vector.load %arg10[%c1_55, %c0_56, %c0_57] : memref<4x8x1xf32, #tpu.memory_space<vmem>>, vector<1x8x1xf32>
      %101 = vector.shape_cast %100 : vector<1x8x1xf32> to vector<8x1xf32>
      %102 = vector.shape_cast %75 : vector<8x1xf32> to vector<1x8x1xf32>
      tpu.vector_store %arg10[%c1_55, %c0_56, %c0_57], %102 {strides = array<i32>} : memref<4x8x1xf32, #tpu.memory_space<vmem>>, vector<1x8x1xf32>,
      %c0_58 = arith.constant 0 : index
      %c16 = arith.constant 16 : index
      %103 = vector.load %arg9[%c0_58, %c16] : memref<8x32xbf16, #tpu.memory_space<vmem>>, vector<8x8xbf16>
      %104 = vector.extract_strided_slice %16 {offsets = [0, 16], sizes = [8, 8], strides = [1, 1]} : vector<8x64xbf16> to vector<8x8xbf16>
      %105 = vector.extract_strided_slice %16 {offsets = [0, 48], sizes = [8, 8], strides = [1, 1]} : vector<8x64xbf16> to vector<8x8xbf16>
      %cst_59 = arith.constant dense<0.000000e+00> : vector<8x8xf32>
      %106 = tpu.matmul %103, %104, %cst_59 {dimension_numbers = #tpu.dot_dimension_numbers<[1], [1], [0], [0], [0, 0, 1, 0], [], []>} : vector<8x8xbf16>, vector<8x8xbf16>, vector<8x8xf32> -> vector<8x8xf32>
      %107 = arith.addf %106, %28 : vector<8x8xf32>
      %c2 = arith.constant 2 : index
      %c0_60 = arith.constant 0 : index
      %c0_61 = arith.constant 0 : index
      %108 = vector.load %arg10[%c2, %c0_60, %c0_61] : memref<4x8x1xf32, #tpu.memory_space<vmem>>, vector<1x8x1xf32>
      %109 = vector.shape_cast %108 : vector<1x8x1xf32> to vector<8x1xf32>
      %cst_62 = arith.constant dense<0xFF800000> : vector<8xf32>
      %110 = vector.multi_reduction <maximumf>, %107, %cst_62 [1] : vector<8x8xf32> to vector<8xf32>
      %111 = vector.shape_cast %110 : vector<8xf32> to vector<8x1xf32>
      %112 = arith.maximumf %109, %111 : vector<8x1xf32>
      %113 = arith.subf %109, %112 : vector<8x1xf32>
      %114 = math.exp %113 : vector<8x1xf32>
      %115 = vector.broadcast %112 : vector<8x1xf32> to vector<8x8xf32>
      %116 = arith.subf %107, %115 : vector<8x8xf32>
      %117 = math.exp %116 : vector<8x8xf32>
      %c2_63 = arith.constant 2 : index
      %c0_64 = arith.constant 0 : index
      %c0_65 = arith.constant 0 : index
      %118 = vector.load %arg11[%c2_63, %c0_64, %c0_65] : memref<4x8x1xf32, #tpu.memory_space<vmem>>, vector<1x8x1xf32>
      %119 = vector.shape_cast %118 : vector<1x8x1xf32> to vector<8x1xf32>
      %120 = arith.mulf %114, %119 : vector<8x1xf32>
      %cst_66 = arith.constant dense<0.000000e+00> : vector<8xf32>
      %121 = vector.multi_reduction <add>, %117, %cst_66 [1] : vector<8x8xf32> to vector<8xf32>
      %122 = vector.shape_cast %121 : vector<8xf32> to vector<8x1xf32>
      %123 = arith.addf %120, %122 : vector<8x1xf32>
      %c2_67 = arith.constant 2 : index
      %c0_68 = arith.constant 0 : index
      %c0_69 = arith.constant 0 : index
      %124 = vector.load %arg11[%c2_67, %c0_68, %c0_69] : memref<4x8x1xf32, #tpu.memory_space<vmem>>, vector<1x8x1xf32>
      %125 = vector.shape_cast %124 : vector<1x8x1xf32> to vector<8x1xf32>
      %126 = vector.shape_cast %123 : vector<8x1xf32> to vector<1x8x1xf32>
      tpu.vector_store %arg11[%c2_67, %c0_68, %c0_69], %126 {strides = array<i32>} : memref<4x8x1xf32, #tpu.memory_space<vmem>>, vector<1x8x1xf32>,
      %c2_70 = arith.constant 2 : index
      %c0_71 = arith.constant 0 : index
      %c0_72 = arith.constant 0 : index
      %127 = vector.load %arg12[%c2_70, %c0_71, %c0_72] : memref<4x8x8xf32, #tpu.memory_space<vmem>>, vector<1x8x8xf32>
      %128 = vector.shape_cast %127 : vector<1x8x8xf32> to vector<8x8xf32>
      %129 = vector.broadcast %114 : vector<8x1xf32> to vector<8x8xf32>
      %130 = arith.mulf %129, %128 : vector<8x8xf32>
      %131 = arith.truncf %117 : vector<8x8xf32> to vector<8x8xbf16>
      %cst_73 = arith.constant dense<0.000000e+00> : vector<8x8xf32>
      %132 = tpu.matmul %131, %105, %cst_73 {dimension_numbers = #tpu.dot_dimension_numbers<[1], [0], [0], [1], [0, 0, 1, 1], [], []>} : vector<8x8xbf16>, vector<8x8xbf16>, vector<8x8xf32> -> vector<8x8xf32>
      %133 = arith.addf %130, %132 : vector<8x8xf32>
      %c2_74 = arith.constant 2 : index
      %c0_75 = arith.constant 0 : index
      %c0_76 = arith.constant 0 : index
      %134 = vector.load %arg12[%c2_74, %c0_75, %c0_76] : memref<4x8x8xf32, #tpu.memory_space<vmem>>, vector<1x8x8xf32>
      %135 = vector.shape_cast %134 : vector<1x8x8xf32> to vector<8x8xf32>
      %136 = vector.shape_cast %133 : vector<8x8xf32> to vector<1x8x8xf32>
      tpu.vector_store %arg12[%c2_74, %c0_75, %c0_76], %136 {strides = array<i32>} : memref<4x8x8xf32, #tpu.memory_space<vmem>>, vector<1x8x8xf32>,
      %c2_77 = arith.constant 2 : index
      %c0_78 = arith.constant 0 : index
      %c0_79 = arith.constant 0 : index
      %137 = vector.load %arg10[%c2_77, %c0_78, %c0_79] : memref<4x8x1xf32, #tpu.memory_space<vmem>>, vector<1x8x1xf32>
      %138 = vector.shape_cast %137 : vector<1x8x1xf32> to vector<8x1xf32>
      %139 = vector.shape_cast %112 : vector<8x1xf32> to vector<1x8x1xf32>
      tpu.vector_store %arg10[%c2_77, %c0_78, %c0_79], %139 {strides = array<i32>} : memref<4x8x1xf32, #tpu.memory_space<vmem>>, vector<1x8x1xf32>,
      %c0_80 = arith.constant 0 : index
      %c24 = arith.constant 24 : index
      %140 = vector.load %arg9[%c0_80, %c24] : memref<8x32xbf16, #tpu.memory_space<vmem>>, vector<8x8xbf16>
      %141 = vector.extract_strided_slice %16 {offsets = [0, 24], sizes = [8, 8], strides = [1, 1]} : vector<8x64xbf16> to vector<8x8xbf16>
      %142 = vector.extract_strided_slice %16 {offsets = [0, 56], sizes = [8, 8], strides = [1, 1]} : vector<8x64xbf16> to vector<8x8xbf16>
      %cst_81 = arith.constant dense<0.000000e+00> : vector<8x8xf32>
      %143 = tpu.matmul %140, %141, %cst_81 {dimension_numbers = #tpu.dot_dimension_numbers<[1], [1], [0], [0], [0, 0, 1, 0], [], []>} : vector<8x8xbf16>, vector<8x8xbf16>, vector<8x8xf32> -> vector<8x8xf32>
      %144 = arith.addf %143, %28 : vector<8x8xf32>
      %c3 = arith.constant 3 : index
      %c0_82 = arith.constant 0 : index
      %c0_83 = arith.constant 0 : index
      %145 = vector.load %arg10[%c3, %c0_82, %c0_83] : memref<4x8x1xf32, #tpu.memory_space<vmem>>, vector<1x8x1xf32>
      %146 = vector.shape_cast %145 : vector<1x8x1xf32> to vector<8x1xf32>
      %cst_84 = arith.constant dense<0xFF800000> : vector<8xf32>
      %147 = vector.multi_reduction <maximumf>, %144, %cst_84 [1] : vector<8x8xf32> to vector<8xf32>
      %148 = vector.shape_cast %147 : vector<8xf32> to vector<8x1xf32>
      %149 = arith.maximumf %146, %148 : vector<8x1xf32>
      %150 = arith.subf %146, %149 : vector<8x1xf32>
      %151 = math.exp %150 : vector<8x1xf32>
      %152 = vector.broadcast %149 : vector<8x1xf32> to vector<8x8xf32>
      %153 = arith.subf %144, %152 : vector<8x8xf32>
      %154 = math.exp %153 : vector<8x8xf32>
      %c3_85 = arith.constant 3 : index
      %c0_86 = arith.constant 0 : index
      %c0_87 = arith.constant 0 : index
      %155 = vector.load %arg11[%c3_85, %c0_86, %c0_87] : memref<4x8x1xf32, #tpu.memory_space<vmem>>, vector<1x8x1xf32>
      %156 = vector.shape_cast %155 : vector<1x8x1xf32> to vector<8x1xf32>
      %157 = arith.mulf %151, %156 : vector<8x1xf32>
      %cst_88 = arith.constant dense<0.000000e+00> : vector<8xf32>
      %158 = vector.multi_reduction <add>, %154, %cst_88 [1] : vector<8x8xf32> to vector<8xf32>
      %159 = vector.shape_cast %158 : vector<8xf32> to vector<8x1xf32>
      %160 = arith.addf %157, %159 : vector<8x1xf32>
      %c3_89 = arith.constant 3 : index
      %c0_90 = arith.constant 0 : index
      %c0_91 = arith.constant 0 : index
      %161 = vector.load %arg11[%c3_89, %c0_90, %c0_91] : memref<4x8x1xf32, #tpu.memory_space<vmem>>, vector<1x8x1xf32>
      %162 = vector.shape_cast %161 : vector<1x8x1xf32> to vector<8x1xf32>
      %163 = vector.shape_cast %160 : vector<8x1xf32> to vector<1x8x1xf32>
      tpu.vector_store %arg11[%c3_89, %c0_90, %c0_91], %163 {strides = array<i32>} : memref<4x8x1xf32, #tpu.memory_space<vmem>>, vector<1x8x1xf32>,
      %c3_92 = arith.constant 3 : index
      %c0_93 = arith.constant 0 : index
      %c0_94 = arith.constant 0 : index
      %164 = vector.load %arg12[%c3_92, %c0_93, %c0_94] : memref<4x8x8xf32, #tpu.memory_space<vmem>>, vector<1x8x8xf32>
      %165 = vector.shape_cast %164 : vector<1x8x8xf32> to vector<8x8xf32>
      %166 = vector.broadcast %151 : vector<8x1xf32> to vector<8x8xf32>
      %167 = arith.mulf %166, %165 : vector<8x8xf32>
      %168 = arith.truncf %154 : vector<8x8xf32> to vector<8x8xbf16>
      %cst_95 = arith.constant dense<0.000000e+00> : vector<8x8xf32>
      %169 = tpu.matmul %168, %142, %cst_95 {dimension_numbers = #tpu.dot_dimension_numbers<[1], [0], [0], [1], [0, 0, 1, 1], [], []>} : vector<8x8xbf16>, vector<8x8xbf16>, vector<8x8xf32> -> vector<8x8xf32>
      %170 = arith.addf %167, %169 : vector<8x8xf32>
      %c3_96 = arith.constant 3 : index
      %c0_97 = arith.constant 0 : index
      %c0_98 = arith.constant 0 : index
      %171 = vector.load %arg12[%c3_96, %c0_97, %c0_98] : memref<4x8x8xf32, #tpu.memory_space<vmem>>, vector<1x8x8xf32>
      %172 = vector.shape_cast %171 : vector<1x8x8xf32> to vector<8x8xf32>
      %173 = vector.shape_cast %170 : vector<8x8xf32> to vector<1x8x8xf32>
      tpu.vector_store %arg12[%c3_96, %c0_97, %c0_98], %173 {strides = array<i32>} : memref<4x8x8xf32, #tpu.memory_space<vmem>>, vector<1x8x8xf32>,
      %c3_99 = arith.constant 3 : index
      %c0_100 = arith.constant 0 : index
      %c0_101 = arith.constant 0 : index
      %174 = vector.load %arg10[%c3_99, %c0_100, %c0_101] : memref<4x8x1xf32, #tpu.memory_space<vmem>>, vector<1x8x1xf32>
      %175 = vector.shape_cast %174 : vector<1x8x1xf32> to vector<8x1xf32>
      %176 = vector.shape_cast %149 : vector<8x1xf32> to vector<1x8x1xf32>
      tpu.vector_store %arg10[%c3_99, %c0_100, %c0_101], %176 {strides = array<i32>} : memref<4x8x1xf32, #tpu.memory_space<vmem>>, vector<1x8x1xf32>,
    } else {
    }
    %c0_i32_3 = arith.constant 0 : i32
    %9 = arith.cmpi eq, %arg2, %c0_i32_3 : i32
    %10 = arith.extui %9 : i1 to i32
    %c0_i32_4 = arith.constant 0 : i32
    %11 = arith.cmpi ne, %10, %c0_i32_4 : i32
    scf.if %11 {
      %cst = arith.constant 0.000000e+00 : f32
      %12 = vector.broadcast %cst : f32 to vector<8x32xf32>
      %c0 = arith.constant 0 : index
      %c0_5 = arith.constant 0 : index
      %c0_6 = arith.constant 0 : index
      %13 = vector.load %arg11[%c0, %c0_5, %c0_6] : memref<4x8x1xf32, #tpu.memory_space<vmem>>, vector<1x8x1xf32>
      %14 = vector.shape_cast %13 : vector<1x8x1xf32> to vector<8x1xf32>
      %15 = tpu.reciprocal %14 {approx = true} : vector<8x1xf32> -> vector<8x1xf32>
      %c0_7 = arith.constant 0 : index
      %c0_8 = arith.constant 0 : index
      %c0_9 = arith.constant 0 : index
      %16 = vector.load %arg12[%c0_7, %c0_8, %c0_9] : memref<4x8x8xf32, #tpu.memory_space<vmem>>, vector<1x8x8xf32>
      %17 = vector.shape_cast %16 : vector<1x8x8xf32> to vector<8x8xf32>
      %18 = vector.broadcast %15 : vector<8x1xf32> to vector<8x8xf32>
      %19 = arith.mulf %17, %18 : vector<8x8xf32>
      %20 = arith.truncf %19 : vector<8x8xf32> to vector<8x8xbf16>
      %c0_10 = arith.constant 0 : index
      %c0_11 = arith.constant 0 : index
      %c0_12 = arith.constant 0 : index
      %21 = vector.load %arg6[%c0_10, %c0_11, %c0_12] : memref<4x8x32xbf16, #tpu.memory_space<vmem>>, vector<1x8x32xbf16>
      %22 = vector.shape_cast %21 : vector<1x8x32xbf16> to vector<8x32xbf16>
      %cst_13 = arith.constant dense<0.000000e+00> : vector<8x32xf32>
      %23 = tpu.matmul %20, %22, %cst_13 {dimension_numbers = #tpu.dot_dimension_numbers<[1], [0], [0], [1], [0, 0, 1, 1], [], []>} : vector<8x8xbf16>, vector<8x32xbf16>, vector<8x32xf32> -> vector<8x32xf32>
      %24 = arith.addf %12, %23 : vector<8x32xf32>
      %c1 = arith.constant 1 : index
      %c0_14 = arith.constant 0 : index
      %c0_15 = arith.constant 0 : index
      %25 = vector.load %arg11[%c1, %c0_14, %c0_15] : memref<4x8x1xf32, #tpu.memory_space<vmem>>, vector<1x8x1xf32>
      %26 = vector.shape_cast %25 : vector<1x8x1xf32> to vector<8x1xf32>
      %27 = tpu.reciprocal %26 {approx = true} : vector<8x1xf32> -> vector<8x1xf32>
      %c1_16 = arith.constant 1 : index
      %c0_17 = arith.constant 0 : index
      %c0_18 = arith.constant 0 : index
      %28 = vector.load %arg12[%c1_16, %c0_17, %c0_18] : memref<4x8x8xf32, #tpu.memory_space<vmem>>, vector<1x8x8xf32>
      %29 = vector.shape_cast %28 : vector<1x8x8xf32> to vector<8x8xf32>
      %30 = vector.broadcast %27 : vector<8x1xf32> to vector<8x8xf32>
      %31 = arith.mulf %29, %30 : vector<8x8xf32>
      %32 = arith.truncf %31 : vector<8x8xf32> to vector<8x8xbf16>
      %c1_19 = arith.constant 1 : index
      %c0_20 = arith.constant 0 : index
      %c0_21 = arith.constant 0 : index
      %33 = vector.load %arg6[%c1_19, %c0_20, %c0_21] : memref<4x8x32xbf16, #tpu.memory_space<vmem>>, vector<1x8x32xbf16>
      %34 = vector.shape_cast %33 : vector<1x8x32xbf16> to vector<8x32xbf16>
      %cst_22 = arith.constant dense<0.000000e+00> : vector<8x32xf32>
      %35 = tpu.matmul %32, %34, %cst_22 {dimension_numbers = #tpu.dot_dimension_numbers<[1], [0], [0], [1], [0, 0, 1, 1], [], []>} : vector<8x8xbf16>, vector<8x32xbf16>, vector<8x32xf32> -> vector<8x32xf32>
      %36 = arith.addf %24, %35 : vector<8x32xf32>
      %c2 = arith.constant 2 : index
      %c0_23 = arith.constant 0 : index
      %c0_24 = arith.constant 0 : index
      %37 = vector.load %arg11[%c2, %c0_23, %c0_24] : memref<4x8x1xf32, #tpu.memory_space<vmem>>, vector<1x8x1xf32>
      %38 = vector.shape_cast %37 : vector<1x8x1xf32> to vector<8x1xf32>
      %39 = tpu.reciprocal %38 {approx = true} : vector<8x1xf32> -> vector<8x1xf32>
      %c2_25 = arith.constant 2 : index
      %c0_26 = arith.constant 0 : index
      %c0_27 = arith.constant 0 : index
      %40 = vector.load %arg12[%c2_25, %c0_26, %c0_27] : memref<4x8x8xf32, #tpu.memory_space<vmem>>, vector<1x8x8xf32>
      %41 = vector.shape_cast %40 : vector<1x8x8xf32> to vector<8x8xf32>
      %42 = vector.broadcast %39 : vector<8x1xf32> to vector<8x8xf32>
      %43 = arith.mulf %41, %42 : vector<8x8xf32>
      %44 = arith.truncf %43 : vector<8x8xf32> to vector<8x8xbf16>
      %c2_28 = arith.constant 2 : index
      %c0_29 = arith.constant 0 : index
      %c0_30 = arith.constant 0 : index
      %45 = vector.load %arg6[%c2_28, %c0_29, %c0_30] : memref<4x8x32xbf16, #tpu.memory_space<vmem>>, vector<1x8x32xbf16>
      %46 = vector.shape_cast %45 : vector<1x8x32xbf16> to vector<8x32xbf16>
      %cst_31 = arith.constant dense<0.000000e+00> : vector<8x32xf32>
      %47 = tpu.matmul %44, %46, %cst_31 {dimension_numbers = #tpu.dot_dimension_numbers<[1], [0], [0], [1], [0, 0, 1, 1], [], []>} : vector<8x8xbf16>, vector<8x32xbf16>, vector<8x32xf32> -> vector<8x32xf32>
      %48 = arith.addf %36, %47 : vector<8x32xf32>
      %c3 = arith.constant 3 : index
      %c0_32 = arith.constant 0 : index
      %c0_33 = arith.constant 0 : index
      %49 = vector.load %arg11[%c3, %c0_32, %c0_33] : memref<4x8x1xf32, #tpu.memory_space<vmem>>, vector<1x8x1xf32>
      %50 = vector.shape_cast %49 : vector<1x8x1xf32> to vector<8x1xf32>
      %51 = tpu.reciprocal %50 {approx = true} : vector<8x1xf32> -> vector<8x1xf32>
      %c3_34 = arith.constant 3 : index
      %c0_35 = arith.constant 0 : index
      %c0_36 = arith.constant 0 : index
      %52 = vector.load %arg12[%c3_34, %c0_35, %c0_36] : memref<4x8x8xf32, #tpu.memory_space<vmem>>, vector<1x8x8xf32>
      %53 = vector.shape_cast %52 : vector<1x8x8xf32> to vector<8x8xf32>
      %54 = vector.broadcast %51 : vector<8x1xf32> to vector<8x8xf32>
      %55 = arith.mulf %53, %54 : vector<8x8xf32>
      %56 = arith.truncf %55 : vector<8x8xf32> to vector<8x8xbf16>
      %c3_37 = arith.constant 3 : index
      %c0_38 = arith.constant 0 : index
      %c0_39 = arith.constant 0 : index
      %57 = vector.load %arg6[%c3_37, %c0_38, %c0_39] : memref<4x8x32xbf16, #tpu.memory_space<vmem>>, vector<1x8x32xbf16>
      %58 = vector.shape_cast %57 : vector<1x8x32xbf16> to vector<8x32xbf16>
      %cst_40 = arith.constant dense<0.000000e+00> : vector<8x32xf32>
      %59 = tpu.matmul %56, %58, %cst_40 {dimension_numbers = #tpu.dot_dimension_numbers<[1], [0], [0], [1], [0, 0, 1, 1], [], []>} : vector<8x8xbf16>, vector<8x32xbf16>, vector<8x32xf32> -> vector<8x32xf32>
      %60 = arith.addf %48, %59 : vector<8x32xf32>
      %c0_41 = arith.constant 0 : index
      %c0_42 = arith.constant 0 : index
      %61 = vector.load %arg7[%c0_41, %c0_42] : memref<1x32xf32, #tpu.memory_space<vmem>>, vector<1x32xf32>
      %62 = vector.broadcast %61 : vector<1x32xf32> to vector<8x32xf32>
      %63 = arith.addf %60, %62 : vector<8x32xf32>
      %c0_43 = arith.constant 0 : index
      %c0_44 = arith.constant 0 : index
      %c0_45 = arith.constant 0 : index
      %64 = vector.load %arg8[%c0_43, %c0_44, %c0_45] : memref<1x8x32xf32, #tpu.memory_space<vmem>>, vector<1x8x32xf32>
      %65 = vector.shape_cast %64 : vector<1x8x32xf32> to vector<8x32xf32>
      %66 = vector.shape_cast %63 : vector<8x32xf32> to vector<1x8x32xf32>
      tpu.vector_store %arg8[%c0_43, %c0_44, %c0_45], %66 {strides = array<i32>} : memref<1x8x32xf32, #tpu.memory_space<vmem>>, vector<1x8x32xf32>,
    } else {
    }
    return
  }
  func.func @transform_0(%arg0: i32, %arg1: i32, %arg2: i32) -> (i32, i32, i32) {
    %c0_i32 = arith.constant 0 : i32
    %c0_i32_0 = arith.constant 0 : i32
    return %arg0, %arg1, %c0_i32 : i32, i32, i32
  }
  func.func @transform_1(%arg0: i32, %arg1: i32, %arg2: i32) -> (i32, i32, i32) {
    %c0_i32 = arith.constant 0 : i32
    %c0_i32_0 = arith.constant 0 : i32
    return %arg0, %arg2, %c0_i32 : i32, i32, i32
  }
  func.func @transform_2(%arg0: i32, %arg1: i32, %arg2: i32) -> (i32, i32) {
    %c0_i32 = arith.constant 0 : i32
    %c0_i32_0 = arith.constant 0 : i32
    %c0_i32_1 = arith.constant 0 : i32
    return %c0_i32, %c0_i32_0 : i32, i32
  }
  func.func @transform_3(%arg0: i32, %arg1: i32, %arg2: i32) -> (i32, i32, i32) {
    %c0_i32 = arith.constant 0 : i32
    %c0_i32_0 = arith.constant 0 : i32
    %c0_i32_1 = arith.constant 0 : i32
    %c0_i32_2 = arith.constant 0 : i32
    return %c0_i32, %c0_i32_0, %c0_i32_1 : i32, i32, i32
  }
  func.func @transform_4(%arg0: i32, %arg1: i32, %arg2: i32) -> (i32, i32) {
    %c0_i32 = arith.constant 0 : i32
    %c0_i32_0 = arith.constant 0 : i32
    %c0_i32_1 = arith.constant 0 : i32
    return %c0_i32, %c0_i32_0 : i32, i32
  }
  func.func @transform_5(%arg0: i32, %arg1: i32, %arg2: i32) -> (i32, i32, i32) {
    %c0_i32 = arith.constant 0 : i32
    %c0_i32_0 = arith.constant 0 : i32
    return %arg0, %arg1, %c0_i32 : i32, i32, i32
  }
}

</mosaic_0001>

<llo_original>
// kernel: tpu_custom_call.1
$region0: #{tpu_custom_call.1}
  #allocation0 [shape = 'u32[]', space=smem, size = 0x4, offset = 0x4, fixed_abs, tag = 'smem constant byte address 0x4 - core index']
  #allocation1 [shape = 'u32[144,128]{1,0:T(1,128)}', space=vmem, size = 0x12000, scoped, tag = 'internal scratch']
  #allocation2 [shape = 'bf16[8,32]{1,0:T(8,128)(2,1)}', space=vmem, size = 0x800, scoped, tag = 'scratch operand']
  #allocation3 [shape = 'f32[4,8,1]{2,1,0:T(8,128)}', space=vmem, size = 0x4000, scoped, tag = 'scratch operand']
  #allocation4 [shape = 'f32[4,8,1]{2,1,0:T(8,128)}', space=vmem, size = 0x4000, scoped, tag = 'scratch operand']
  #allocation5 [shape = 'f32[4,8,8]{2,1,0:T(8,128)}', space=vmem, size = 0x4000, scoped, tag = 'scratch operand']
  %s0 = inlined_call_operand.hbm [shape: bf16[2,8,32], index: 0, kind: input, shape index: {}]
  %s1 = inlined_call_operand.hbm [shape: bf16[2,8,32], index: 1, kind: input, shape index: {}]
  %s2 = inlined_call_operand.hbm [shape: bf16[32,96], index: 2, kind: input, shape index: {}]
  %s3 = inlined_call_operand.hbm [shape: bf16[4,8,32], index: 3, kind: input, shape index: {}]
  %s4 = inlined_call_operand.vmem [shape: f32[1,32], index: 4, kind: input, shape index: {}]
  %s5 = inlined_call_operand.hbm [shape: f32[2,8,32], index: 5, kind: output, shape index: {}]
  %s6 = sld [smem:[#allocation0]]
  $region81: #{tpu_custom_call.1} parent=0
    _
  %s8 = ssub.s32 1, %s6
  %s9 = scalar_select 0, %s8, %s6
  $region1: #{tpu_custom_call.1} parent=0
    #allocation6 [shape = 'u8[4096]{0}', space=vmem, size = 0x1000, scoped, tag = 'input window, operand 0']
    #allocation7 [shape = 's32[2]{0}', space=sflag, size = 0x8, scoped, tag = 'scoped memory for tpu_custom_call.1']
    #allocation8 [shape = 's32[2]{0}', space=sflag, size = 0x8, scoped, tag = 'scoped memory for tpu_custom_call.1']
    #allocation9 [shape = 'u8[4096]{0}', space=vmem, size = 0x1000, scoped, tag = 'input window, operand 1']
    #allocation10 [shape = 's32[2]{0}', space=sflag, size = 0x8, scoped, tag = 'scoped memory for tpu_custom_call.1']
    #allocation11 [shape = 'u8[8192]{0}', space=vmem, size = 0x2000, scoped, tag = 'input window, operand 2, single buffered']
    #allocation12 [shape = 'u8[8192]{0}', space=vmem, size = 0x2000, scoped, tag = 'input window, operand 3, single buffered']
    #allocation13 [shape = 's32[1]{0}', space=sflag, size = 0x4, scoped, tag = 'scoped memory for tpu_custom_call.1']
    #allocation14 [shape = 'u8[8192]{0}', space=vmem, size = 0x2000, scoped, tag = 'output window, operand 0']
    %10 = vsyncpa [#allocation7], 0
    %s11 = scalar_lea.sflag [#allocation7], 1
    %12 = vsyncpa %s11, 0
    %13 = vsyncpa [#allocation10], 0
    %s14 = scalar_lea.sflag [#allocation10], 1
    %15 = vsyncpa %s14, 0
    %16 = vsyncpa [#allocation13], 0
    %17 = vsyncpa [#allocation8], 0
    %s18 = scalar_lea.sflag [#allocation8], 1
    %19 = vsyncpa %s18, 0
    loop: start=0, step=1, limit=4
    $region2: #{tpu_custom_call.1} parent=1 // loop_pre_header
      _
    $region3: #{tpu_custom_call.1} parent=1 // loop_header
      %s21 = sphi 0, %s25
      %p22 = scmp.ge.s32.totalorder %s21, 4
      %s28 = sphi 0, %s47
      %s29 = sphi 0, %s43
      %s30 = sphi 0, %s39
      %s31 = sphi 0, %s28
      %s32 = sphi 0, %s29
      %s33 = sphi 0, %s30
      %s34 = sphi 0, %s31
      %s35 = sphi 0, %s32
      %s36 = sphi 0, %s33
      %s52 = sphi 0, %s54
      %s55 = sphi 0, %s52
      %s56 = sphi 0, %s55
      %s72 = sphi 0, %s56
      %s80 = sphi 0, %s82
      %s83 = sphi 0, %s80
      %s84 = sphi 0, %s83
      %s100 = sphi 0, %s84
      %s104 = sphi 0, %s104
      %s106 = sphi 0, %s104
      %s107 = sphi 0, %s106
      %s121 = sphi 0, %s107
      %s125 = sphi 0, %s125
      %s127 = sphi 0, %s125
      %s128 = sphi 0, %s127
      %s142 = sphi 0, %s128
      %s146 = sphi 0, %s146
      %s148 = sphi 0, %s146
      %s149 = sphi 0, %s148
      %s163 = sphi 0, %s149
      %s171 = sphi 0, %s173
      %s174 = sphi 0, %s171
      %s175 = sphi 0, %s174
      %s191 = sphi 0, %s175
    $region4: #{tpu_custom_call.1} parent=1 // loop_header_branch
      %24 = sbr.rel (%p22) target = $region8
    $region5: #{tpu_custom_call.1} parent=1 // loop_body
      %s26 = ssub.s32 %s21, 1
      %s27 = ssub.s32 %s21, 2
      %s37 = sadd.s32 1, %s30
      %p38 = scmp.ge.s32.totalorder %s37, 1
      %s39 = scalar_select %p38, 0, %s37
      %s40 = sadd.s32 1, %s29
      %s41 = scalar_select %p38, %s40, %s29
      %p42 = scmp.ge.s32.totalorder %s41, 1
      %s43 = scalar_select %p42, 0, %s41
      %s44 = sadd.s32 1, %s28
      %s45 = scalar_select %p42, %s44, %s28
      %p46 = scmp.ge.s32.totalorder %s45, 2
      %s47 = scalar_select %p46, 0, %s45
      %s48 = ssub.s32 %s28, %s47
      %s49 = ssub.s32 %s29, %s43
      %s50 = sor.u32 %s48, %s49
      %p51 = scmp.eq.s32.totalorder %s50, 0
      %s53 = sadd.s32 %s52, 1
      %s54 = scalar_select %p51, %s52, %s53
      %p57 = pneg %p51
      %p58 = scmp.eq.s32.totalorder %s21, 1
      %p59 = por %p57, %p58
      %p60 = scmp.ne.s32.totalorder %s52, %s55
      %p61 = scmp.eq.s32.totalorder %s21, 0
      %p62 = por %p60, %p61
      %p63 = scmp.ne.s32.totalorder %s52, %s55
      %p64 = scmp.eq.s32.totalorder %s26, 1
      %p65 = por %p63, %p64
      %p66 = scmp.ne.s32.totalorder %s55, %s56
      %p67 = scmp.eq.s32.totalorder %s26, 0
      %p68 = por %p66, %p67
      %p69 = scmp.ne.s32.totalorder %s55, %s56
      %p70 = scmp.eq.s32.totalorder %s27, 1
      %p71 = por %p69, %p70
      %p73 = scmp.ne.s32.totalorder %s56, %s72
      %p74 = scmp.eq.s32.totalorder %s27, 0
      %p75 = por %p73, %p74
      %s76 = ssub.s32 %s28, %s47
      %s77 = ssub.s32 %s30, %s39
      %s78 = sor.u32 %s76, %s77
      %p79 = scmp.eq.s32.totalorder %s78, 0
      %s81 = sadd.s32 %s80, 1
      %s82 = scalar_select %p79, %s80, %s81
      %p85 = pneg %p79
      %p86 = scmp.eq.s32.totalorder %s21, 1
      %p87 = por %p85, %p86
      %p88 = scmp.ne.s32.totalorder %s80, %s83
      %p89 = scmp.eq.s32.totalorder %s21, 0
      %p90 = por %p88, %p89
      %p91 = scmp.ne.s32.totalorder %s80, %s83
      %p92 = scmp.eq.s32.totalorder %s26, 1
      %p93 = por %p91, %p92
      %p94 = scmp.ne.s32.totalorder %s83, %s84
      %p95 = scmp.eq.s32.totalorder %s26, 0
      %p96 = por %p94, %p95
      %p97 = scmp.ne.s32.totalorder %s83, %s84
      %p98 = scmp.eq.s32.totalorder %s27, 1
      %p99 = por %p97, %p98
      %p101 = scmp.ne.s32.totalorder %s84, %s100
      %p102 = scmp.eq.s32.totalorder %s27, 0
      %p103 = por %p101, %p102
      %s105 = sadd.s32 %s104, 1
      %p108 = scmp.eq.s32.totalorder %s21, 1
      %p109 = scmp.ne.s32.totalorder %s104, %s106
      %p110 = scmp.eq.s32.totalorder %s21, 0
      %p111 = por %p109, %p110
      %p112 = scmp.ne.s32.totalorder %s104, %s106
      %p113 = scmp.eq.s32.totalorder %s26, 1
      %p114 = por %p112, %p113
      %p115 = scmp.ne.s32.totalorder %s106, %s107
      %p116 = scmp.eq.s32.totalorder %s26, 0
      %p117 = por %p115, %p116
      %p118 = scmp.ne.s32.totalorder %s106, %s107
      %p119 = scmp.eq.s32.totalorder %s27, 1
      %p120 = por %p118, %p119
      %p122 = scmp.ne.s32.totalorder %s107, %s121
      %p123 = scmp.eq.s32.totalorder %s27, 0
      %p124 = por %p122, %p123
      %s126 = sadd.s32 %s125, 1
      %p129 = scmp.eq.s32.totalorder %s21, 1
      %p130 = scmp.ne.s32.totalorder %s125, %s127
      %p131 = scmp.eq.s32.totalorder %s21, 0
      %p132 = por %p130, %p131
      %p133 = scmp.ne.s32.totalorder %s125, %s127
      %p134 = scmp.eq.s32.totalorder %s26, 1
      %p135 = por %p133, %p134
      %p136 = scmp.ne.s32.totalorder %s127, %s128
      %p137 = scmp.eq.s32.totalorder %s26, 0
      %p138 = por %p136, %p137
      %p139 = scmp.ne.s32.totalorder %s127, %s128
      %p140 = scmp.eq.s32.totalorder %s27, 1
      %p141 = por %p139, %p140
      %p143 = scmp.ne.s32.totalorder %s128, %s142
      %p144 = scmp.eq.s32.totalorder %s27, 0
      %p145 = por %p143, %p144
      %s147 = sadd.s32 %s146, 1
      %p150 = scmp.eq.s32.totalorder %s21, 1
      %p151 = scmp.ne.s32.totalorder %s146, %s148
      %p152 = scmp.eq.s32.totalorder %s21, 0
      %p153 = por %p151, %p152
      %p154 = scmp.ne.s32.totalorder %s146, %s148
      %p155 = scmp.eq.s32.totalorder %s26, 1
      %p156 = por %p154, %p155
      %p157 = scmp.ne.s32.totalorder %s148, %s149
      %p158 = scmp.eq.s32.totalorder %s26, 0
      %p159 = por %p157, %p158
      %p160 = scmp.ne.s32.totalorder %s148, %s149
      %p161 = scmp.eq.s32.totalorder %s27, 1
      %p162 = por %p160, %p161
      %p164 = scmp.ne.s32.totalorder %s149, %s163
      %p165 = scmp.eq.s32.totalorder %s27, 0
      %p166 = por %p164, %p165
      %s167 = ssub.s32 %s28, %s47
      %s168 = ssub.s32 %s29, %s43
      %s169 = sor.u32 %s167, %s168
      %p170 = scmp.eq.s32.totalorder %s169, 0
      %s172 = sadd.s32 %s171, 1
      %s173 = scalar_select %p170, %s171, %s172
      %p176 = pneg %p170
      %p177 = scmp.eq.s32.totalorder %s21, 1
      %p178 = por %p176, %p177
      %p179 = scmp.ne.s32.totalorder %s171, %s174
      %p180 = scmp.eq.s32.totalorder %s21, 0
      %p181 = por %p179, %p180
      %p182 = scmp.ne.s32.totalorder %s171, %s174
      %p183 = scmp.eq.s32.totalorder %s26, 1
      %p184 = por %p182, %p183
      %p185 = scmp.ne.s32.totalorder %s174, %s175
      %p186 = scmp.eq.s32.totalorder %s26, 0
      %p187 = por %p185, %p186
      %p188 = scmp.ne.s32.totalorder %s174, %s175
      %p189 = scmp.eq.s32.totalorder %s27, 1
      %p190 = por %p188, %p189
      %p192 = scmp.ne.s32.totalorder %s175, %s191
      %p193 = scmp.eq.s32.totalorder %s27, 0
      %p194 = por %p192, %p193
      %p195 = scmp.le.s32.totalorder 1, %s21
      %p196 = scmp.lt.s32.totalorder %s21, 3
      %p197 = pnand %p195, %p196
      %p198 = pneg %p197
      // Predicated region
      $region9: #{tpu_custom_call.1} parent=5 // pred_check
        _
      $region10: #{tpu_custom_call.1} parent=5 // pred_check_branch
        %200 = sbr.rel (%p197) target = $region12
      $region11: #{tpu_custom_call.1} parent=5 // pred_region
        %s201 = ssub.s32 %s21, 1
        // Predicated region
        $region13: #{tpu_custom_call.1} parent=11 // pred_check
          %p202 = pneg %p117
        $region14: #{tpu_custom_call.1} parent=11 // pred_check_branch
          %204 = sbr.rel (%p202) target = $region16
        $region15: #{tpu_custom_call.1} parent=11 // pred_region
          %s206 = ssub.s32 256, 256
          %207 = vsyncadd [#allocation10], %s206
          %s208 = sshll.u32 [#allocation11], 4
          %s209 = int_to_ptr.vmem [resolvable:$true] %s208
          %214 = dma.hbm_to_vmem [thread:$0]  %s2, 256, %s209, [#allocation10], 64, 64, 4
        $region16: #{tpu_custom_call.1} parent=11 // pred_fallthru
          _
        // Predicated region
        $region17: #{tpu_custom_call.1} parent=11 // pred_check
          %p215 = pneg %p138
        $region18: #{tpu_custom_call.1} parent=11 // pred_check_branch
          %217 = sbr.rel (%p215) target = $region20
        $region19: #{tpu_custom_call.1} parent=11 // pred_region
          %s219 = ssub.s32 256, 256
          %220 = vsyncadd [#allocation13], %s219
          %s221 = sshll.u32 [#allocation12], 4
          %s222 = int_to_ptr.vmem [resolvable:$true] %s221
          %227 = dma.hbm_to_vmem [thread:$0]  %s3, 256, %s222, [#allocation13], 64, 64, 4
        $region20: #{tpu_custom_call.1} parent=11 // pred_fallthru
          _
        // Predicated region
        $region21: #{tpu_custom_call.1} parent=11 // pred_check
          %p228 = pneg %p159
        $region22: #{tpu_custom_call.1} parent=11 // pred_check_branch
          %230 = sbr.rel (%p228) target = $region24
        $region23: #{tpu_custom_call.1} parent=11 // pred_region
          _
        $region24: #{tpu_custom_call.1} parent=11 // pred_fallthru
          _
      $region12: #{tpu_custom_call.1} parent=5 // pred_fallthru
        _
      %p231 = scmp.lt.s32.totalorder %s21, 2
      // Predicated region
      $region25: #{tpu_custom_call.1} parent=5 // pred_check
        %p232 = pneg %p231
      $region26: #{tpu_custom_call.1} parent=5 // pred_check_branch
        %234 = sbr.rel (%p232) target = $region28
      $region27: #{tpu_custom_call.1} parent=5 // pred_region
        // Predicated region
        $region29: #{tpu_custom_call.1} parent=27 // pred_check
          %p235 = pneg %p62
        $region30: #{tpu_custom_call.1} parent=27 // pred_check_branch
          %237 = sbr.rel (%p235) target = $region32
        $region31: #{tpu_custom_call.1} parent=27 // pred_region
          %s238 = sand.u32 %s52, 1
          %s239 = scalar_lea.sflag [#allocation7], %s238
          %s240 = sand.u32 %s52, 1
          %s241 = smul.addr %s240, 4
          %s242 = scalar_lea.vmem [#allocation6], %s241
          %s244 = ssub.s32 64, 64
          %245 = vsyncadd %s239, %s244
          %s246 = sadd.s32 %s29, %s28
          %s247 = smul.addr %s246, 64
          %s248 = scalar_lea.hbm %s0, %s247
          %s250 = sshll.u32 %s242, 4
          %s251 = int_to_ptr.vmem [resolvable:$true] %s250
          %253 = dma.hbm_to_vmem [thread:$0]  %s248, 64, %s251, %s239
        $region32: #{tpu_custom_call.1} parent=27 // pred_fallthru
          _
        // Predicated region
        $region33: #{tpu_custom_call.1} parent=27 // pred_check
          %p254 = pneg %p90
        $region34: #{tpu_custom_call.1} parent=27 // pred_check_branch
          %256 = sbr.rel (%p254) target = $region36
        $region35: #{tpu_custom_call.1} parent=27 // pred_region
          %s257 = sand.u32 %s21, 1
          %s258 = scalar_lea.sflag [#allocation10], %s257
          %s259 = sand.u32 %s80, 1
          %s260 = smul.addr %s259, 4
          %s261 = scalar_lea.vmem [#allocation9], %s260
          %s263 = ssub.s32 64, 64
          %264 = vsyncadd %s258, %s263
          %s265 = sadd.s32 %s30, %s28
          %s266 = smul.addr %s265, 64
          %s267 = scalar_lea.hbm %s1, %s266
          %s269 = sshll.u32 %s261, 4
          %s270 = int_to_ptr.vmem [resolvable:$true] %s269
          %272 = dma.hbm_to_vmem [thread:$0]  %s267, 64, %s270, %s258
        $region36: #{tpu_custom_call.1} parent=27 // pred_fallthru
          _
      $region28: #{tpu_custom_call.1} parent=5 // pred_fallthru
        _
      %p273 = scmp.le.s32.totalorder 1, %s21
      %p274 = scmp.lt.s32.totalorder %s21, 3
      %p275 = pnand %p273, %p274
      %p276 = pneg %p275
      // Predicated region
      $region37: #{tpu_custom_call.1} parent=5 // pred_check
        _
      $region38: #{tpu_custom_call.1} parent=5 // pred_check_branch
        %278 = sbr.rel (%p275) target = $region40
      $region39: #{tpu_custom_call.1} parent=5 // pred_region
        %s279 = ssub.s32 %s21, 1
        %s280 = sand.u32 %s55, 1
        %s281 = scalar_lea.sflag [#allocation7], %s280
        %s282 = sand.u32 %s55, 1
        %s283 = smul.addr %s282, 4
        %s284 = scalar_lea.vmem [#allocation6], %s283
        // Predicated region
        $region41: #{tpu_custom_call.1} parent=39 // pred_check
          %p285 = pneg %p68
        $region42: #{tpu_custom_call.1} parent=39 // pred_check_branch
          %287 = sbr.rel (%p285) target = $region44
        $region43: #{tpu_custom_call.1} parent=39 // pred_region
          %288 = dma.done %s281, 64
        $region44: #{tpu_custom_call.1} parent=39 // pred_fallthru
          _
        %s289 = sand.u32 %s26, 1
        %s290 = scalar_lea.sflag [#allocation10], %s289
        %s291 = sand.u32 %s83, 1
        %s292 = smul.addr %s291, 4
        %s293 = scalar_lea.vmem [#allocation9], %s292
        // Predicated region
        $region45: #{tpu_custom_call.1} parent=39 // pred_check
          %p294 = pneg %p96
        $region46: #{tpu_custom_call.1} parent=39 // pred_check_branch
          %296 = sbr.rel (%p294) target = $region48
        $region47: #{tpu_custom_call.1} parent=39 // pred_region
          %297 = dma.done %s290, 64
        $region48: #{tpu_custom_call.1} parent=39 // pred_fallthru
          _
        // Predicated region
        $region49: #{tpu_custom_call.1} parent=39 // pred_check
          %p298 = pneg %p117
        $region50: #{tpu_custom_call.1} parent=39 // pred_check_branch
          %300 = sbr.rel (%p298) target = $region52
        $region51: #{tpu_custom_call.1} parent=39 // pred_region
          %301 = dma.done [#allocation10], 256
        $region52: #{tpu_custom_call.1} parent=39 // pred_fallthru
          _
        // Predicated region
        $region53: #{tpu_custom_call.1} parent=39 // pred_check
          %p302 = pneg %p138
        $region54: #{tpu_custom_call.1} parent=39 // pred_check_branch
          %304 = sbr.rel (%p302) target = $region56
        $region55: #{tpu_custom_call.1} parent=39 // pred_region
          %305 = dma.done [#allocation13], 256
        $region56: #{tpu_custom_call.1} parent=39 // pred_fallthru
          _
        %s306 = sand.u32 %s55, 1
        %s307 = scalar_lea.sflag [#allocation7], %s306
        %s308 = sand.u32 %s55, 1
        %s309 = smul.addr %s308, 4
        %s310 = scalar_lea.vmem [#allocation6], %s309
        %p311 = pneg %p68
        %p312 = pneg %p65
        %s313 = sand.u32 %s26, 1
        %s314 = scalar_lea.sflag [#allocation10], %s313
        %s315 = sand.u32 %s83, 1
        %s316 = smul.addr %s315, 4
        %s317 = scalar_lea.vmem [#allocation9], %s316
        %p318 = pneg %p96
        %p319 = pneg %p93
        %p320 = pneg %p117
        %p321 = pneg %p114
        %p322 = pneg %p138
        %p323 = pneg %p135
        %p324 = pneg %p159
        %p325 = pneg %p156
        %p326 = pneg %p187
        %p327 = pneg %p184
        %s328 = sand.u32 %s174, 1
        %s329 = scalar_lea.sflag [#allocation8], %s328
        %s330 = sand.u32 %s174, 1
        %s331 = smul.addr %s330, 8
        %s332 = scalar_lea.vmem [#allocation14], %s331
        %p334 = scmp.eq.s32.totalorder %s33, 0
        // Predicated region
        $region57: #{tpu_custom_call.1} parent=39 // pred_check
          %p335 = pneg %p334
        $region58: #{tpu_custom_call.1} parent=39 // pred_check_branch
          %337 = sbr.rel (%p335) target = $region60
        $region59: #{tpu_custom_call.1} parent=39 // pred_region
          %v338 = vld [vmem:[%s284] sm:$0xf]
          %v339 = vld [vmem:[#allocation11] sm:$0xf]
          %v340 = vld [vmem:[#allocation11 + $0x4] sm:$0xf]
          %v341 = vld [vmem:[#allocation11 + $0x8] sm:$0xf]
          %v342 = vld [vmem:[#allocation11 + $0xc] sm:$0xf]
          %v347 = vunpack.c.l.b16 %v339
          %v348 = vunpack.c.l.b16 %v340
          %v349 = vunpack.c.l.b16 %v341
          %v350 = vunpack.c.l.b16 %v342
          %v351 = vpack.c.b16 %v348, %v347
          %v352 = vpack.c.b16 %v350, %v349
          %vm355 = vcmask 261120
          %v357 = vsel %vm355, %v338, 0
          %359 = vmatprep.subr.bf16.mxu0 0
          %360 = vmatpush1.bf16.msra.mxu0 %v351
          %361 = vmatprep.subr.bf16.mxu0 0
          %362 = vmatpush1.bf16.msra.mxu0 %v352
          %363 = vmatprep.subr.bf16.mxu0 0
          %364 = vmatpush1.bf16.msra.mxu0 0
          %365 = vmatprep.subr.bf16.mxu0 0
          %366 = vmatpush1.bf16.msra.mxu0 0
          %367 = vmatprep.subr.bf16.mxu0 0
          %368 = vmatpush1.bf16.msra.mxu0 0
          %369 = vmatprep.subr.bf16.mxu0 0
          %370 = vmatpush1.bf16.msra.mxu0 0
          %371 = vmatprep.subr.bf16.mxu0 0
          %372 = vmatpush1.bf16.msra.mxu0 0
          %373 = vmatprep.subr.bf16.mxu0 0
          %374 = vmatpush1.bf16.msra.mxu0 0
          %375 = vmatprep.subr.bf16.mxu0 0
          %376 = vmatpush1.bf16.msra.mxu0 0
          %377 = vmatprep.subr.bf16.mxu0 0
          %378 = vmatpush1.bf16.msra.mxu0 0
          %379 = vmatprep.subr.bf16.mxu0 0
          %380 = vmatpush1.bf16.msra.mxu0 0
          %381 = vmatprep.subr.bf16.mxu0 0
          %382 = vmatpush1.bf16.msra.mxu0 0
          %383 = vmatprep.subr.bf16.mxu0 0
          %384 = vmatpush1.bf16.msra.mxu0 0
          %385 = vmatprep.subr.bf16.mxu0 0
          %386 = vmatpush1.bf16.msra.mxu0 0
          %387 = vmatprep.subr.bf16.mxu0 0
          %388 = vmatpush1.bf16.msra.mxu0 0
          %389 = vmatprep.subr.bf16.mxu0 0
          %390 = vmatpush1.bf16.msra.mxu0 0
          %391 = vmatprep.mubr.bf16.mxu0 0
          %392 = vmatmul.mubr.bf16.gmra.mrb[0].mxu0 %v357
          %v393 = vpop.f32.mrb[0].mxu0
          %v394 = vadd.f32 0.0, %v393
          %v395 = vpop.f32.mrb[0].mxu0
          %v396 = vpop.f32.mrb[0].mxu0
          %v397 = vpop.f32.mrb[0].mxu0
          %398 = vdwg.mxu0
          %v399 = vmul.f32 %v394, 0.35355338
          %v400 = vpack.c.bf16 %v399, %v399
          %vm401 = vcmask 257024
          %402 = vst.msk [vmem:[#allocation2] sm:$0xf] %vm401, %v400
          %vm403 = vcmask 7168
          %404 = vst.msk [vmem:[#allocation3] sm:$0xff] %vm403, -inf
          %405 = vst.msk [vmem:[#allocation3 + $0x8] sm:$0xff] %vm403, -inf
          %406 = vst.msk [vmem:[#allocation3 + $0x10] sm:$0xff] %vm403, -inf
          %407 = vst.msk [vmem:[#allocation3 + $0x18] sm:$0xff] %vm403, -inf
          %408 = vst.msk [vmem:[#allocation4] sm:$0xff] %vm403, 0.0
          %409 = vst.msk [vmem:[#allocation4 + $0x8] sm:$0xff] %vm403, 0.0
          %410 = vst.msk [vmem:[#allocation4 + $0x10] sm:$0xff] %vm403, 0.0
          %411 = vst.msk [vmem:[#allocation4 + $0x18] sm:$0xff] %vm403, 0.0
          %vm412 = vcmask 64512
          %413 = vst.msk [vmem:[#allocation5] sm:$0xff] %vm412, 0.0
          %414 = vst.msk [vmem:[#allocation5 + $0x8] sm:$0xff] %vm412, 0.0
          %415 = vst.msk [vmem:[#allocation5 + $0x10] sm:$0xff] %vm412, 0.0
          %416 = vst.msk [vmem:[#allocation5 + $0x18] sm:$0xff] %vm412, 0.0
        $region60: #{tpu_custom_call.1} parent=39 // pred_fallthru
          _
        %s417 = smul.u32 %s33, 8
        %s418 = smul.u32 %s32, 8
        %s419 = sadd.s32 %s418, 7
        %p420 = scmp.le.s32.totalorder %s417, %s419
        // Predicated region
        $region61: #{tpu_custom_call.1} parent=39 // pred_check
          %p421 = pneg %p420
        $region62: #{tpu_custom_call.1} parent=39 // pred_check_branch
          %423 = sbr.rel (%p421) target = $region64
        $region63: #{tpu_custom_call.1} parent=39 // pred_region
          %v424 = vld [vmem:[%s293] sm:$0xf]
          %v425 = vld [vmem:[#allocation11] sm:$0xf]
          %v426 = vld [vmem:[#allocation11 + $0x4] sm:$0xf]
          %v427 = vld [vmem:[#allocation11 + $0x8] sm:$0xf]
          %v428 = vld [vmem:[#allocation11 + $0xc] sm:$0xf]
          %v433 = vunpack.c.l.b16 %v425
          %v434 = vunpack.c.l.b16 %v426
          %v435 = vunpack.c.l.b16 %v427
          %v436 = vunpack.c.l.b16 %v428
          %v437 = vpack.c.b16 %v434, %v433
          %v438 = vpack.c.b16 %v436, %v435
          %439 = vrot.lane.b32.xlu0 %v437, 96
          %v440 = vpop.permute.xlu0 %439
          %441 = vrot.lane.b32.xlu0 %v438, 96
          %v442 = vpop.permute.xlu0 %441
          %vm445 = vcmask 261120
          %v447 = vsel %vm445, %v424, 0
          %449 = vmatprep.subr.bf16.mxu0 0
          %450 = vmatpush1.bf16.msra.mxu0 %v440
          %451 = vmatprep.subr.bf16.mxu0 0
          %452 = vmatpush1.bf16.msra.mxu0 %v442
          %453 = vmatprep.subr.bf16.mxu0 0
          %454 = vmatpush1.bf16.msra.mxu0 0
          %455 = vmatprep.subr.bf16.mxu0 0
          %456 = vmatpush1.bf16.msra.mxu0 0
          %457 = vmatprep.subr.bf16.mxu0 0
          %458 = vmatpush1.bf16.msra.mxu0 0
          %459 = vmatprep.subr.bf16.mxu0 0
          %460 = vmatpush1.bf16.msra.mxu0 0
          %461 = vmatprep.subr.bf16.mxu0 0
          %462 = vmatpush1.bf16.msra.mxu0 0
          %463 = vmatprep.subr.bf16.mxu0 0
          %464 = vmatpush1.bf16.msra.mxu0 0
          %465 = vmatprep.subr.bf16.mxu0 0
          %466 = vmatpush1.bf16.msra.mxu0 0
          %467 = vmatprep.subr.bf16.mxu0 0
          %468 = vmatpush1.bf16.msra.mxu0 0
          %469 = vmatprep.subr.bf16.mxu0 0
          %470 = vmatpush1.bf16.msra.mxu0 0
          %471 = vmatprep.subr.bf16.mxu0 0
          %472 = vmatpush1.bf16.msra.mxu0 0
          %473 = vmatprep.subr.bf16.mxu0 0
          %474 = vmatpush1.bf16.msra.mxu0 0
          %475 = vmatprep.subr.bf16.mxu0 0
          %476 = vmatpush1.bf16.msra.mxu0 0
          %477 = vmatprep.subr.bf16.mxu0 0
          %478 = vmatpush1.bf16.msra.mxu0 0
          %479 = vmatprep.subr.bf16.mxu0 0
          %480 = vmatpush1.bf16.msra.mxu0 0
          %481 = vmatprep.mubr.bf16.mxu0 0
          %482 = vmatmul.mubr.bf16.gmra.mrb[0].mxu0 %v447
          %v483 = vpop.f32.mrb[0].mxu0
          %v484 = vadd.f32 0.0, %v483
          %v485 = vpop.f32.mrb[0].mxu0
          %v486 = vpop.f32.mrb[0].mxu0
          %v487 = vpop.f32.mrb[0].mxu0
          %488 = vdwg.mxu0
          %v489 = vpack.c.bf16 %v484, %v484
          %v490 = vlaneseq
          %v491 = vshrl.u32 %v490, 7
          %v492 = vstv %s418
          %v493 = vadd.s32 %v492, %v491
          %v494 = vlaneseq
          %v495 = vand.u32 %v494, 127
          %v496 = vstv %s417
          %v497 = vadd.s32 %v496, %v495
          %vm498 = vcmp.le.s32.totalorder %v497, %v493
          %v499 = vsel %vm498, 0.0, -1e+30
          %v500 = vld [vmem:[#allocation2] sm:$0xf]
          %vm501 = vcmask 64512
          %v503 = vsel %vm501, %v500, 0
          %v506 = vsel %vm501, %v489, 0
          %508 = vmatprep.subr.bf16.mxu0 0
          %509 = vmatpush1.bf16.xpose.msra.mxu0 %v506
          %510 = vmatprep.subr.bf16.mxu0 0
          %511 = vmatpush1.bf16.xpose.msra.mxu0 0
          %512 = vmatprep.subr.bf16.mxu0 0
          %513 = vmatpush1.bf16.xpose.msra.mxu0 0
          %514 = vmatprep.subr.bf16.mxu0 0
          %515 = vmatpush1.bf16.xpose.msra.mxu0 0
          %516 = vmatprep.subr.bf16.mxu0 0
          %517 = vmatpush1.bf16.xpose.msra.mxu0 0
          %518 = vmatprep.subr.bf16.mxu0 0
          %519 = vmatpush1.bf16.xpose.msra.mxu0 0
          %520 = vmatprep.subr.bf16.mxu0 0
          %521 = vmatpush1.bf16.xpose.msra.mxu0 0
          %522 = vmatprep.subr.bf16.mxu0 0
          %523 = vmatpush1.bf16.xpose.msra.mxu0 0
          %524 = vmatprep.subr.bf16.mxu0 0
          %525 = vmatpush1.bf16.xpose.msra.mxu0 0
          %526 = vmatprep.subr.bf16.mxu0 0
          %527 = vmatpush1.bf16.xpose.msra.mxu0 0
          %528 = vmatprep.subr.bf16.mxu0 0
          %529 = vmatpush1.bf16.xpose.msra.mxu0 0
          %530 = vmatprep.subr.bf16.mxu0 0
          %531 = vmatpush1.bf16.xpose.msra.mxu0 0
          %532 = vmatprep.subr.bf16.mxu0 0
          %533 = vmatpush1.bf16.xpose.msra.mxu0 0
          %534 = vmatprep.subr.bf16.mxu0 0
          %535 = vmatpush1.bf16.xpose.msra.mxu0 0
          %536 = vmatprep.subr.bf16.mxu0 0
          %537 = vmatpush1.bf16.xpose.msra.mxu0 0
          %538 = vmatprep.subr.bf16.mxu0 0
          %539 = vmatpush1.bf16.xpose.msra.mxu0 0
          %540 = vmatprep.mubr.bf16.mxu0 0
          %541 = vmatmul.mubr.bf16.gmra.mrb[0].mxu0 %v503
          %v542 = vpop.f32.mrb[0].mxu0
          %v543 = vadd.f32 %v499, %v542
          %v544 = vpop.f32.mrb[0].mxu0
          %v545 = vpop.f32.mrb[0].mxu0
          %v546 = vpop.f32.mrb[0].mxu0
          %547 = vdwg.mxu0
          %v548 = vld [vmem:[#allocation3] sm:$0xff]
          %v549 = vsel %vm501, %v543, -inf
          %550 = vmax.xlane.f32.xlu0 %v549
          %v551 = vpop.xlane.xlu0 %550
          %v552 = vmax.f32 %v548, %v551
          %v553 = vsub.f32 %v548, %v552
          %v554 = vmul.f32 %v553, 1.442695
          %v555 = vpow.pop %v554
          %557 = vset.pattern.permute.xlu0 0
          %558 = vperm.xlu0 %557, %v552
          %v559 = vpop.permute.xlu0 %558
          %v561 = vsub.f32 %v543, %v559
          %v562 = vmul.f32 %v561, 1.442695
          %v563 = vpow.pop %v562
          %v564 = vld [vmem:[#allocation4] sm:$0xff]
          %v565 = vmul.f32 %v555, %v564
          %v566 = vsel %vm501, %v563, 0.0
          %567 = vadd.xlane.f32.xlu0 %v566
          %v568 = vpop.xlane.xlu0 %567
          %v569 = vadd.f32 %v565, %v568
          %vm570 = vcmask 7168
          %571 = vst.msk [vmem:[#allocation4] sm:$0xff] %vm570, %v569
          %v572 = vld [vmem:[#allocation5] sm:$0xff]
          %574 = vset.pattern.permute.xlu0 0
          %575 = vperm.xlu0 %574, %v555
          %v576 = vpop.permute.xlu0 %575
          %v578 = vmul.f32 %v576, %v572
          %v579 = vpack.c.bf16 %v563, %v563
          %581 = vrot.lane.b32.xlu0 %v489, 96
          %v582 = vpop.permute.xlu0 %581
          %v584 = vsel %vm501, %v579, 0
          %vm586 = vcmask 1043456
          %v588 = vsel %vm586, %v582, 0
          %590 = vmatprep.subr.bf16.mxu0 0
          %591 = vmatpush1.bf16.msra.mxu0 %v588
          %592 = vmatprep.subr.bf16.mxu0 0
          %593 = vmatpush1.bf16.msra.mxu0 0
          %594 = vmatprep.subr.bf16.mxu0 0
          %595 = vmatpush1.bf16.msra.mxu0 0
          %596 = vmatprep.subr.bf16.mxu0 0
          %597 = vmatpush1.bf16.msra.mxu0 0
          %598 = vmatprep.subr.bf16.mxu0 0
          %599 = vmatpush1.bf16.msra.mxu0 0
          %600 = vmatprep.subr.bf16.mxu0 0
          %601 = vmatpush1.bf16.msra.mxu0 0
          %602 = vmatprep.subr.bf16.mxu0 0
          %603 = vmatpush1.bf16.msra.mxu0 0
          %604 = vmatprep.subr.bf16.mxu0 0
          %605 = vmatpush1.bf16.msra.mxu0 0
          %606 = vmatprep.subr.bf16.mxu0 0
          %607 = vmatpush1.bf16.msra.mxu0 0
          %608 = vmatprep.subr.bf16.mxu0 0
          %609 = vmatpush1.bf16.msra.mxu0 0
          %610 = vmatprep.subr.bf16.mxu0 0
          %611 = vmatpush1.bf16.msra.mxu0 0
          %612 = vmatprep.subr.bf16.mxu0 0
          %613 = vmatpush1.bf16.msra.mxu0 0
          %614 = vmatprep.subr.bf16.mxu0 0
          %615 = vmatpush1.bf16.msra.mxu0 0
          %616 = vmatprep.subr.bf16.mxu0 0
          %617 = vmatpush1.bf16.msra.mxu0 0
          %618 = vmatprep.subr.bf16.mxu0 0
          %619 = vmatpush1.bf16.msra.mxu0 0
          %620 = vmatprep.subr.bf16.mxu0 0
          %621 = vmatpush1.bf16.msra.mxu0 0
          %622 = vmatprep.mubr.bf16.mxu0 0
          %623 = vmatmul.mubr.bf16.gmra.mrb[0].mxu0 %v584
          %v624 = vpop.f32.mrb[0].mxu0
          %v625 = vadd.f32 0.0, %v624
          %v626 = vpop.f32.mrb[0].mxu0
          %v627 = vpop.f32.mrb[0].mxu0
          %v628 = vpop.f32.mrb[0].mxu0
          %629 = vdwg.mxu0
          %v630 = vadd.f32 %v578, %v625
          %631 = vst.msk [vmem:[#allocation5] sm:$0xff] %vm501, %v630
          %632 = vst.msk [vmem:[#allocation3] sm:$0xff] %vm570, %v552
          %v633 = vld [vmem:[#allocation2] sm:$0xf]
          %v635 = vunpack.c.l.b16 %v633
          %v636 = vpack.c.b16 %v635, %v635
          %637 = vrot.lane.b32.xlu0 %v636, 120
          %v638 = vpop.permute.xlu0 %637
          %639 = vrot.lane.b32.xlu0 %v489, 120
          %v640 = vpop.permute.xlu0 %639
          %v642 = vsel %vm501, %v638, 0
          %v645 = vsel %vm501, %v640, 0
          %647 = vmatprep.subr.bf16.mxu0 0
          %648 = vmatpush1.bf16.xpose.msra.mxu0 %v645
          %649 = vmatprep.subr.bf16.mxu0 0
          %650 = vmatpush1.bf16.xpose.msra.mxu0 0
          %651 = vmatprep.subr.bf16.mxu0 0
          %652 = vmatpush1.bf16.xpose.msra.mxu0 0
          %653 = vmatprep.subr.bf16.mxu0 0
          %654 = vmatpush1.bf16.xpose.msra.mxu0 0
          %655 = vmatprep.subr.bf16.mxu0 0
          %656 = vmatpush1.bf16.xpose.msra.mxu0 0
          %657 = vmatprep.subr.bf16.mxu0 0
          %658 = vmatpush1.bf16.xpose.msra.mxu0 0
          %659 = vmatprep.subr.bf16.mxu0 0
          %660 = vmatpush1.bf16.xpose.msra.mxu0 0
          %661 = vmatprep.subr.bf16.mxu0 0
          %662 = vmatpush1.bf16.xpose.msra.mxu0 0
          %663 = vmatprep.subr.bf16.mxu0 0
          %664 = vmatpush1.bf16.xpose.msra.mxu0 0
          %665 = vmatprep.subr.bf16.mxu0 0
          %666 = vmatpush1.bf16.xpose.msra.mxu0 0
          %667 = vmatprep.subr.bf16.mxu0 0
          %668 = vmatpush1.bf16.xpose.msra.mxu0 0
          %669 = vmatprep.subr.bf16.mxu0 0
          %670 = vmatpush1.bf16.xpose.msra.mxu0 0
          %671 = vmatprep.subr.bf16.mxu0 0
          %672 = vmatpush1.bf16.xpose.msra.mxu0 0
          %673 = vmatprep.subr.bf16.mxu0 0
          %674 = vmatpush1.bf16.xpose.msra.mxu0 0
          %675 = vmatprep.subr.bf16.mxu0 0
          %676 = vmatpush1.bf16.xpose.msra.mxu0 0
          %677 = vmatprep.subr.bf16.mxu0 0
          %678 = vmatpush1.bf16.xpose.msra.mxu0 0
          %679 = vmatprep.mubr.bf16.mxu0 0
          %680 = vmatmul.mubr.bf16.gmra.mrb[0].mxu0 %v642
          %v681 = vpop.f32.mrb[0].mxu0
          %v682 = vadd.f32 %v499, %v681
          %v683 = vpop.f32.mrb[0].mxu0
          %v684 = vpop.f32.mrb[0].mxu0
          %v685 = vpop.f32.mrb[0].mxu0
          %686 = vdwg.mxu0
          %s687 = scalar_lea.vmem [#allocation3], 8
          %v688 = vld [vmem:[%s687] sm:$0xff]
          %v689 = vsel %vm501, %v682, -inf
          %690 = vmax.xlane.f32.xlu0 %v689
          %v691 = vpop.xlane.xlu0 %690
          %v692 = vmax.f32 %v688, %v691
          %v693 = vsub.f32 %v688, %v692
          %v694 = vmul.f32 %v693, 1.442695
          %v695 = vpow.pop %v694
          %697 = vset.pattern.permute.xlu0 0
          %698 = vperm.xlu0 %697, %v692
          %v699 = vpop.permute.xlu0 %698
          %v701 = vsub.f32 %v682, %v699
          %v702 = vmul.f32 %v701, 1.442695
          %v703 = vpow.pop %v702
          %s704 = scalar_lea.vmem [#allocation4], 8
          %v705 = vld [vmem:[%s704] sm:$0xff]
          %v706 = vmul.f32 %v695, %v705
          %v707 = vsel %vm501, %v703, 0.0
          %708 = vadd.xlane.f32.xlu0 %v707
          %v709 = vpop.xlane.xlu0 %708
          %v710 = vadd.f32 %v706, %v709
          %711 = vst.msk [vmem:[%s704] sm:$0xff] %vm570, %v710
          %s712 = scalar_lea.vmem [#allocation5], 8
          %v713 = vld [vmem:[%s712] sm:$0xff]
          %715 = vset.pattern.permute.xlu0 0
          %716 = vperm.xlu0 %715, %v695
          %v717 = vpop.permute.xlu0 %716
          %v719 = vmul.f32 %v717, %v713
          %v720 = vpack.c.bf16 %v703, %v703
          %721 = vrot.lane.b32.xlu0 %v489, 88
          %v722 = vpop.permute.xlu0 %721
          %v724 = vsel %vm501, %v720, 0
          %v727 = vsel %vm586, %v722, 0
          %729 = vmatprep.subr.bf16.mxu0 0
          %730 = vmatpush1.bf16.msra.mxu0 %v727
          %731 = vmatprep.subr.bf16.mxu0 0
          %732 = vmatpush1.bf16.msra.mxu0 0
          %733 = vmatprep.subr.bf16.mxu0 0
          %734 = vmatpush1.bf16.msra.mxu0 0
          %735 = vmatprep.subr.bf16.mxu0 0
          %736 = vmatpush1.bf16.msra.mxu0 0
          %737 = vmatprep.subr.bf16.mxu0 0
          %738 = vmatpush1.bf16.msra.mxu0 0
          %739 = vmatprep.subr.bf16.mxu0 0
          %740 = vmatpush1.bf16.msra.mxu0 0
          %741 = vmatprep.subr.bf16.mxu0 0
          %742 = vmatpush1.bf16.msra.mxu0 0
          %743 = vmatprep.subr.bf16.mxu0 0
          %744 = vmatpush1.bf16.msra.mxu0 0
          %745 = vmatprep.subr.bf16.mxu0 0
          %746 = vmatpush1.bf16.msra.mxu0 0
          %747 = vmatprep.subr.bf16.mxu0 0
          %748 = vmatpush1.bf16.msra.mxu0 0
          %749 = vmatprep.subr.bf16.mxu0 0
          %750 = vmatpush1.bf16.msra.mxu0 0
          %751 = vmatprep.subr.bf16.mxu0 0
          %752 = vmatpush1.bf16.msra.mxu0 0
          %753 = vmatprep.subr.bf16.mxu0 0
          %754 = vmatpush1.bf16.msra.mxu0 0
          %755 = vmatprep.subr.bf16.mxu0 0
          %756 = vmatpush1.bf16.msra.mxu0 0
          %757 = vmatprep.subr.bf16.mxu0 0
          %758 = vmatpush1.bf16.msra.mxu0 0
          %759 = vmatprep.subr.bf16.mxu0 0
          %760 = vmatpush1.bf16.msra.mxu0 0
          %761 = vmatprep.mubr.bf16.mxu0 0
          %762 = vmatmul.mubr.bf16.gmra.mrb[0].mxu0 %v724
          %v763 = vpop.f32.mrb[0].mxu0
          %v764 = vadd.f32 0.0, %v763
          %v765 = vpop.f32.mrb[0].mxu0
          %v766 = vpop.f32.mrb[0].mxu0
          %v767 = vpop.f32.mrb[0].mxu0
          %768 = vdwg.mxu0
          %v769 = vadd.f32 %v719, %v764
          %770 = vst.msk [vmem:[%s712] sm:$0xff] %vm501, %v769
          %771 = vst.msk [vmem:[%s687] sm:$0xff] %vm570, %v692
          %v772 = vld [vmem:[#allocation2] sm:$0xf]
          %v774 = vunpack.c.l.b16 %v772
          %v775 = vpack.c.b16 %v774, %v774
          %776 = vrot.lane.b32.xlu0 %v775, 112
          %v777 = vpop.permute.xlu0 %776
          %778 = vrot.lane.b32.xlu0 %v489, 112
          %v779 = vpop.permute.xlu0 %778
          %v781 = vsel %vm501, %v777, 0
          %v784 = vsel %vm501, %v779, 0
          %786 = vmatprep.subr.bf16.mxu0 0
          %787 = vmatpush1.bf16.xpose.msra.mxu0 %v784
          %788 = vmatprep.subr.bf16.mxu0 0
          %789 = vmatpush1.bf16.xpose.msra.mxu0 0
          %790 = vmatprep.subr.bf16.mxu0 0
          %791 = vmatpush1.bf16.xpose.msra.mxu0 0
          %792 = vmatprep.subr.bf16.mxu0 0
          %793 = vmatpush1.bf16.xpose.msra.mxu0 0
          %794 = vmatprep.subr.bf16.mxu0 0
          %795 = vmatpush1.bf16.xpose.msra.mxu0 0
          %796 = vmatprep.subr.bf16.mxu0 0
          %797 = vmatpush1.bf16.xpose.msra.mxu0 0
          %798 = vmatprep.subr.bf16.mxu0 0
          %799 = vmatpush1.bf16.xpose.msra.mxu0 0
          %800 = vmatprep.subr.bf16.mxu0 0
          %801 = vmatpush1.bf16.xpose.msra.mxu0 0
          %802 = vmatprep.subr.bf16.mxu0 0
          %803 = vmatpush1.bf16.xpose.msra.mxu0 0
          %804 = vmatprep.subr.bf16.mxu0 0
          %805 = vmatpush1.bf16.xpose.msra.mxu0 0
          %806 = vmatprep.subr.bf16.mxu0 0
          %807 = vmatpush1.bf16.xpose.msra.mxu0 0
          %808 = vmatprep.subr.bf16.mxu0 0
          %809 = vmatpush1.bf16.xpose.msra.mxu0 0
          %810 = vmatprep.subr.bf16.mxu0 0
          %811 = vmatpush1.bf16.xpose.msra.mxu0 0
          %812 = vmatprep.subr.bf16.mxu0 0
          %813 = vmatpush1.bf16.xpose.msra.mxu0 0
          %814 = vmatprep.subr.bf16.mxu0 0
          %815 = vmatpush1.bf16.xpose.msra.mxu0 0
          %816 = vmatprep.subr.bf16.mxu0 0
          %817 = vmatpush1.bf16.xpose.msra.mxu0 0
          %818 = vmatprep.mubr.bf16.mxu0 0
          %819 = vmatmul.mubr.bf16.gmra.mrb[0].mxu0 %v781
          %v820 = vpop.f32.mrb[0].mxu0
          %v821 = vadd.f32 %v499, %v820
          %v822 = vpop.f32.mrb[0].mxu0
          %v823 = vpop.f32.mrb[0].mxu0
          %v824 = vpop.f32.mrb[0].mxu0
          %825 = vdwg.mxu0
          %s826 = scalar_lea.vmem [#allocation3], 16
          %v827 = vld [vmem:[%s826] sm:$0xff]
          %v828 = vsel %vm501, %v821, -inf
          %829 = vmax.xlane.f32.xlu0 %v828
          %v830 = vpop.xlane.xlu0 %829
          %v831 = vmax.f32 %v827, %v830
          %v832 = vsub.f32 %v827, %v831
          %v833 = vmul.f32 %v832, 1.442695
          %v834 = vpow.pop %v833
          %836 = vset.pattern.permute.xlu0 0
          %837 = vperm.xlu0 %836, %v831
          %v838 = vpop.permute.xlu0 %837
          %v840 = vsub.f32 %v821, %v838
          %v841 = vmul.f32 %v840, 1.442695
          %v842 = vpow.pop %v841
          %s843 = scalar_lea.vmem [#allocation4], 16
          %v844 = vld [vmem:[%s843] sm:$0xff]
          %v845 = vmul.f32 %v834, %v844
          %v846 = vsel %vm501, %v842, 0.0
          %847 = vadd.xlane.f32.xlu0 %v846
          %v848 = vpop.xlane.xlu0 %847
          %v849 = vadd.f32 %v845, %v848
          %850 = vst.msk [vmem:[%s843] sm:$0xff] %vm570, %v849
          %s851 = scalar_lea.vmem [#allocation5], 16
          %v852 = vld [vmem:[%s851] sm:$0xff]
          %854 = vset.pattern.permute.xlu0 0
          %855 = vperm.xlu0 %854, %v834
          %v856 = vpop.permute.xlu0 %855
          %v858 = vmul.f32 %v856, %v852
          %v859 = vpack.c.bf16 %v842, %v842
          %860 = vrot.lane.b32.xlu0 %v489, 80
          %v861 = vpop.permute.xlu0 %860
          %v863 = vsel %vm501, %v859, 0
          %v866 = vsel %vm586, %v861, 0
          %868 = vmatprep.subr.bf16.mxu0 0
          %869 = vmatpush1.bf16.msra.mxu0 %v866
          %870 = vmatprep.subr.bf16.mxu0 0
          %871 = vmatpush1.bf16.msra.mxu0 0
          %872 = vmatprep.subr.bf16.mxu0 0
          %873 = vmatpush1.bf16.msra.mxu0 0
          %874 = vmatprep.subr.bf16.mxu0 0
          %875 = vmatpush1.bf16.msra.mxu0 0
          %876 = vmatprep.subr.bf16.mxu0 0
          %877 = vmatpush1.bf16.msra.mxu0 0
          %878 = vmatprep.subr.bf16.mxu0 0
          %879 = vmatpush1.bf16.msra.mxu0 0
          %880 = vmatprep.subr.bf16.mxu0 0
          %881 = vmatpush1.bf16.msra.mxu0 0
          %882 = vmatprep.subr.bf16.mxu0 0
          %883 = vmatpush1.bf16.msra.mxu0 0
          %884 = vmatprep.subr.bf16.mxu0 0
          %885 = vmatpush1.bf16.msra.mxu0 0
          %886 = vmatprep.subr.bf16.mxu0 0
          %887 = vmatpush1.bf16.msra.mxu0 0
          %888 = vmatprep.subr.bf16.mxu0 0
          %889 = vmatpush1.bf16.msra.mxu0 0
          %890 = vmatprep.subr.bf16.mxu0 0
          %891 = vmatpush1.bf16.msra.mxu0 0
          %892 = vmatprep.subr.bf16.mxu0 0
          %893 = vmatpush1.bf16.msra.mxu0 0
          %894 = vmatprep.subr.bf16.mxu0 0
          %895 = vmatpush1.bf16.msra.mxu0 0
          %896 = vmatprep.subr.bf16.mxu0 0
          %897 = vmatpush1.bf16.msra.mxu0 0
          %898 = vmatprep.subr.bf16.mxu0 0
          %899 = vmatpush1.bf16.msra.mxu0 0
          %900 = vmatprep.mubr.bf16.mxu0 0
          %901 = vmatmul.mubr.bf16.gmra.mrb[0].mxu0 %v863
          %v902 = vpop.f32.mrb[0].mxu0
          %v903 = vadd.f32 0.0, %v902
          %v904 = vpop.f32.mrb[0].mxu0
          %v905 = vpop.f32.mrb[0].mxu0
          %v906 = vpop.f32.mrb[0].mxu0
          %907 = vdwg.mxu0
          %v908 = vadd.f32 %v858, %v903
          %909 = vst.msk [vmem:[%s851] sm:$0xff] %vm501, %v908
          %910 = vst.msk [vmem:[%s826] sm:$0xff] %vm570, %v831
          %v911 = vld [vmem:[#allocation2] sm:$0xf]
          %v913 = vunpack.c.l.b16 %v911
          %v914 = vpack.c.b16 %v913, %v913
          %915 = vrot.lane.b32.xlu0 %v914, 104
          %v916 = vpop.permute.xlu0 %915
          %917 = vrot.lane.b32.xlu0 %v489, 104
          %v918 = vpop.permute.xlu0 %917
          %v920 = vsel %vm501, %v916, 0
          %v923 = vsel %vm501, %v918, 0
          %925 = vmatprep.subr.bf16.mxu0 0
          %926 = vmatpush1.bf16.xpose.msra.mxu0 %v923
          %927 = vmatprep.subr.bf16.mxu0 0
          %928 = vmatpush1.bf16.xpose.msra.mxu0 0
          %929 = vmatprep.subr.bf16.mxu0 0
          %930 = vmatpush1.bf16.xpose.msra.mxu0 0
          %931 = vmatprep.subr.bf16.mxu0 0
          %932 = vmatpush1.bf16.xpose.msra.mxu0 0
          %933 = vmatprep.subr.bf16.mxu0 0
          %934 = vmatpush1.bf16.xpose.msra.mxu0 0
          %935 = vmatprep.subr.bf16.mxu0 0
          %936 = vmatpush1.bf16.xpose.msra.mxu0 0
          %937 = vmatprep.subr.bf16.mxu0 0
          %938 = vmatpush1.bf16.xpose.msra.mxu0 0
          %939 = vmatprep.subr.bf16.mxu0 0
          %940 = vmatpush1.bf16.xpose.msra.mxu0 0
          %941 = vmatprep.subr.bf16.mxu0 0
          %942 = vmatpush1.bf16.xpose.msra.mxu0 0
          %943 = vmatprep.subr.bf16.mxu0 0
          %944 = vmatpush1.bf16.xpose.msra.mxu0 0
          %945 = vmatprep.subr.bf16.mxu0 0
          %946 = vmatpush1.bf16.xpose.msra.mxu0 0
          %947 = vmatprep.subr.bf16.mxu0 0
          %948 = vmatpush1.bf16.xpose.msra.mxu0 0
          %949 = vmatprep.subr.bf16.mxu0 0
          %950 = vmatpush1.bf16.xpose.msra.mxu0 0
          %951 = vmatprep.subr.bf16.mxu0 0
          %952 = vmatpush1.bf16.xpose.msra.mxu0 0
          %953 = vmatprep.subr.bf16.mxu0 0
          %954 = vmatpush1.bf16.xpose.msra.mxu0 0
          %955 = vmatprep.subr.bf16.mxu0 0
          %956 = vmatpush1.bf16.xpose.msra.mxu0 0
          %957 = vmatprep.mubr.bf16.mxu0 0
          %958 = vmatmul.mubr.bf16.gmra.mrb[0].mxu0 %v920
          %v959 = vpop.f32.mrb[0].mxu0
          %v960 = vadd.f32 %v499, %v959
          %v961 = vpop.f32.mrb[0].mxu0
          %v962 = vpop.f32.mrb[0].mxu0
          %v963 = vpop.f32.mrb[0].mxu0
          %964 = vdwg.mxu0
          %s965 = scalar_lea.vmem [#allocation3], 24
          %v966 = vld [vmem:[%s965] sm:$0xff]
          %v967 = vsel %vm501, %v960, -inf
          %968 = vmax.xlane.f32.xlu0 %v967
          %v969 = vpop.xlane.xlu0 %968
          %v970 = vmax.f32 %v966, %v969
          %v971 = vsub.f32 %v966, %v970
          %v972 = vmul.f32 %v971, 1.442695
          %v973 = vpow.pop %v972
          %975 = vset.pattern.permute.xlu0 0
          %976 = vperm.xlu0 %975, %v970
          %v977 = vpop.permute.xlu0 %976
          %v979 = vsub.f32 %v960, %v977
          %v980 = vmul.f32 %v979, 1.442695
          %v981 = vpow.pop %v980
          %s982 = scalar_lea.vmem [#allocation4], 24
          %v983 = vld [vmem:[%s982] sm:$0xff]
          %v984 = vmul.f32 %v973, %v983
          %v985 = vsel %vm501, %v981, 0.0
          %986 = vadd.xlane.f32.xlu0 %v985
          %v987 = vpop.xlane.xlu0 %986
          %v988 = vadd.f32 %v984, %v987
          %989 = vst.msk [vmem:[%s982] sm:$0xff] %vm570, %v988
          %s990 = scalar_lea.vmem [#allocation5], 24
          %v991 = vld [vmem:[%s990] sm:$0xff]
          %993 = vset.pattern.permute.xlu0 0
          %994 = vperm.xlu0 %993, %v973
          %v995 = vpop.permute.xlu0 %994
          %v997 = vmul.f32 %v995, %v991
          %v998 = vpack.c.bf16 %v981, %v981
          %999 = vrot.lane.b32.xlu0 %v489, 72
          %v1000 = vpop.permute.xlu0 %999
          %v1002 = vsel %vm501, %v998, 0
          %v1005 = vsel %vm586, %v1000, 0
          %1007 = vmatprep.subr.bf16.mxu0 0
          %1008 = vmatpush1.bf16.msra.mxu0 %v1005
          %1009 = vmatprep.subr.bf16.mxu0 0
          %1010 = vmatpush1.bf16.msra.mxu0 0
          %1011 = vmatprep.subr.bf16.mxu0 0
          %1012 = vmatpush1.bf16.msra.mxu0 0
          %1013 = vmatprep.subr.bf16.mxu0 0
          %1014 = vmatpush1.bf16.msra.mxu0 0
          %1015 = vmatprep.subr.bf16.mxu0 0
          %1016 = vmatpush1.bf16.msra.mxu0 0
          %1017 = vmatprep.subr.bf16.mxu0 0
          %1018 = vmatpush1.bf16.msra.mxu0 0
          %1019 = vmatprep.subr.bf16.mxu0 0
          %1020 = vmatpush1.bf16.msra.mxu0 0
          %1021 = vmatprep.subr.bf16.mxu0 0
          %1022 = vmatpush1.bf16.msra.mxu0 0
          %1023 = vmatprep.subr.bf16.mxu0 0
          %1024 = vmatpush1.bf16.msra.mxu0 0
          %1025 = vmatprep.subr.bf16.mxu0 0
          %1026 = vmatpush1.bf16.msra.mxu0 0
          %1027 = vmatprep.subr.bf16.mxu0 0
          %1028 = vmatpush1.bf16.msra.mxu0 0
          %1029 = vmatprep.subr.bf16.mxu0 0
          %1030 = vmatpush1.bf16.msra.mxu0 0
          %1031 = vmatprep.subr.bf16.mxu0 0
          %1032 = vmatpush1.bf16.msra.mxu0 0
          %1033 = vmatprep.subr.bf16.mxu0 0
          %1034 = vmatpush1.bf16.msra.mxu0 0
          %1035 = vmatprep.subr.bf16.mxu0 0
          %1036 = vmatpush1.bf16.msra.mxu0 0
          %1037 = vmatprep.subr.bf16.mxu0 0
          %1038 = vmatpush1.bf16.msra.mxu0 0
          %1039 = vmatprep.mubr.bf16.mxu0 0
          %1040 = vmatmul.mubr.bf16.gmra.mrb[0].mxu0 %v1002
          %v1041 = vpop.f32.mrb[0].mxu0
          %v1042 = vadd.f32 0.0, %v1041
          %v1043 = vpop.f32.mrb[0].mxu0
          %v1044 = vpop.f32.mrb[0].mxu0
          %v1045 = vpop.f32.mrb[0].mxu0
          %1046 = vdwg.mxu0
          %v1047 = vadd.f32 %v997, %v1042
          %1048 = vst.msk [vmem:[%s990] sm:$0xff] %vm501, %v1047
          %1049 = vst.msk [vmem:[%s965] sm:$0xff] %vm570, %v970
        $region64: #{tpu_custom_call.1} parent=39 // pred_fallthru
          _
        // Predicated region
        $region65: #{tpu_custom_call.1} parent=39 // pred_check
          %p1050 = pneg %p334
        $region66: #{tpu_custom_call.1} parent=39 // pred_check_branch
          %1052 = sbr.rel (%p1050) target = $region68
        $region67: #{tpu_custom_call.1} parent=39 // pred_region
          %v1053 = vld [vmem:[#allocation4] sm:$0xff]
          %v1054 = vrcp.pop %v1053
          %v1055 = vld [vmem:[#allocation5] sm:$0xff]
          %1057 = vset.pattern.permute.xlu0 0
          %1058 = vperm.xlu0 %1057, %v1054
          %v1059 = vpop.permute.xlu0 %1058
          %v1061 = vmul.f32 %v1055, %v1059
          %v1062 = vpack.c.bf16 %v1061, %v1061
          %v1063 = vld [vmem:[#allocation12] sm:$0xf]
          %s1064 = scalar_lea.vmem [#allocation4], 8
          %v1065 = vld [vmem:[%s1064] sm:$0xff]
          %v1066 = vrcp.pop %v1065
          %s1067 = scalar_lea.vmem [#allocation5], 8
          %v1068 = vld [vmem:[%s1067] sm:$0xff]
          %1070 = vset.pattern.permute.xlu0 0
          %1071 = vperm.xlu0 %1070, %v1066
          %v1072 = vpop.permute.xlu0 %1071
          %v1074 = vmul.f32 %v1068, %v1072
          %v1075 = vpack.c.bf16 %v1074, %v1074
          %s1076 = scalar_lea.vmem [#allocation12], 4
          %v1077 = vld [vmem:[%s1076] sm:$0xf]
          %vm1078 = vcmask 64512
          %v1080 = vsel %vm1078, %v1075, 0
          %vm1082 = vcmask 1043456
          %v1084 = vsel %vm1082, %v1077, 0
          %1086 = vmatprep.subr.bf16.mxu0 0
          %1087 = vmatpush1.bf16.msra.mxu0 %v1084
          %1088 = vmatprep.subr.bf16.mxu0 0
          %1089 = vmatpush1.bf16.msra.mxu0 0
          %1090 = vmatprep.subr.bf16.mxu0 0
          %1091 = vmatpush1.bf16.msra.mxu0 0
          %1092 = vmatprep.subr.bf16.mxu0 0
          %1093 = vmatpush1.bf16.msra.mxu0 0
          %1094 = vmatprep.subr.bf16.mxu0 0
          %1095 = vmatpush1.bf16.msra.mxu0 0
          %1096 = vmatprep.subr.bf16.mxu0 0
          %1097 = vmatpush1.bf16.msra.mxu0 0
          %1098 = vmatprep.subr.bf16.mxu0 0
          %1099 = vmatpush1.bf16.msra.mxu0 0
          %1100 = vmatprep.subr.bf16.mxu0 0
          %1101 = vmatpush1.bf16.msra.mxu0 0
          %1102 = vmatprep.subr.bf16.mxu0 0
          %1103 = vmatpush1.bf16.msra.mxu0 0
          %1104 = vmatprep.subr.bf16.mxu0 0
          %1105 = vmatpush1.bf16.msra.mxu0 0
          %1106 = vmatprep.subr.bf16.mxu0 0
          %1107 = vmatpush1.bf16.msra.mxu0 0
          %1108 = vmatprep.subr.bf16.mxu0 0
          %1109 = vmatpush1.bf16.msra.mxu0 0
          %1110 = vmatprep.subr.bf16.mxu0 0
          %1111 = vmatpush1.bf16.msra.mxu0 0
          %1112 = vmatprep.subr.bf16.mxu0 0
          %1113 = vmatpush1.bf16.msra.mxu0 0
          %1114 = vmatprep.subr.bf16.mxu0 0
          %1115 = vmatpush1.bf16.msra.mxu0 0
          %1116 = vmatprep.subr.bf16.mxu0 0
          %1117 = vmatpush1.bf16.msra.mxu0 0
          %1118 = vmatprep.mubr.bf16.mxu0 0
          %1119 = vmatmul.mubr.bf16.gmra.mrb[0].mxu0 %v1080
          %v1120 = vpop.f32.mrb[0].mxu0
          %v1121 = vadd.f32 0.0, %v1120
          %v1122 = vpop.f32.mrb[0].mxu0
          %v1123 = vpop.f32.mrb[0].mxu0
          %v1124 = vpop.f32.mrb[0].mxu0
          %1125 = vdwg.mxu0
          %v1127 = vsel %vm1078, %v1062, 0
          %v1130 = vsel %vm1082, %v1063, 0
          %1132 = vmatprep.subr.bf16.mxu0 0
          %1133 = vmatpush1.bf16.msra.mxu0 %v1130
          %1134 = vmatprep.subr.bf16.mxu0 0
          %1135 = vmatpush1.bf16.msra.mxu0 0
          %1136 = vmatprep.subr.bf16.mxu0 0
          %1137 = vmatpush1.bf16.msra.mxu0 0
          %1138 = vmatprep.subr.bf16.mxu0 0
          %1139 = vmatpush1.bf16.msra.mxu0 0
          %1140 = vmatprep.subr.bf16.mxu0 0
          %1141 = vmatpush1.bf16.msra.mxu0 0
          %1142 = vmatprep.subr.bf16.mxu0 0
          %1143 = vmatpush1.bf16.msra.mxu0 0
          %1144 = vmatprep.subr.bf16.mxu0 0
          %1145 = vmatpush1.bf16.msra.mxu0 0
          %1146 = vmatprep.subr.bf16.mxu0 0
          %1147 = vmatpush1.bf16.msra.mxu0 0
          %1148 = vmatprep.subr.bf16.mxu0 0
          %1149 = vmatpush1.bf16.msra.mxu0 0
          %1150 = vmatprep.subr.bf16.mxu0 0
          %1151 = vmatpush1.bf16.msra.mxu0 0
          %1152 = vmatprep.subr.bf16.mxu0 0
          %1153 = vmatpush1.bf16.msra.mxu0 0
          %1154 = vmatprep.subr.bf16.mxu0 0
          %1155 = vmatpush1.bf16.msra.mxu0 0
          %1156 = vmatprep.subr.bf16.mxu0 0
          %1157 = vmatpush1.bf16.msra.mxu0 0
          %1158 = vmatprep.subr.bf16.mxu0 0
          %1159 = vmatpush1.bf16.msra.mxu0 0
          %1160 = vmatprep.subr.bf16.mxu0 0
          %1161 = vmatpush1.bf16.msra.mxu0 0
          %1162 = vmatprep.subr.bf16.mxu0 0
          %1163 = vmatpush1.bf16.msra.mxu0 0
          %1164 = vmatprep.mubr.bf16.mxu0 0
          %1165 = vmatmul.mubr.bf16.gmra.mrb[0].mxu0 %v1127
          %v1166 = vpop.f32.mrb[0].mxu0
          %v1167 = vadd.f32 %v1121, %v1166
          %v1168 = vpop.f32.mrb[0].mxu0
          %v1169 = vpop.f32.mrb[0].mxu0
          %v1170 = vpop.f32.mrb[0].mxu0
          %1171 = vdwg.mxu0
          %s1172 = scalar_lea.vmem [#allocation4], 16
          %v1173 = vld [vmem:[%s1172] sm:$0xff]
          %v1174 = vrcp.pop %v1173
          %s1175 = scalar_lea.vmem [#allocation5], 16
          %v1176 = vld [vmem:[%s1175] sm:$0xff]
          %1178 = vset.pattern.permute.xlu0 0
          %1179 = vperm.xlu0 %1178, %v1174
          %v1180 = vpop.permute.xlu0 %1179
          %v1182 = vmul.f32 %v1176, %v1180
          %v1183 = vpack.c.bf16 %v1182, %v1182
          %s1184 = scalar_lea.vmem [#allocation12], 8
          %v1185 = vld [vmem:[%s1184] sm:$0xf]
          %v1187 = vsel %vm1078, %v1183, 0
          %v1190 = vsel %vm1082, %v1185, 0
          %1192 = vmatprep.subr.bf16.mxu0 0
          %1193 = vmatpush1.bf16.msra.mxu0 %v1190
          %1194 = vmatprep.subr.bf16.mxu0 0
          %1195 = vmatpush1.bf16.msra.mxu0 0
          %1196 = vmatprep.subr.bf16.mxu0 0
          %1197 = vmatpush1.bf16.msra.mxu0 0
          %1198 = vmatprep.subr.bf16.mxu0 0
          %1199 = vmatpush1.bf16.msra.mxu0 0
          %1200 = vmatprep.subr.bf16.mxu0 0
          %1201 = vmatpush1.bf16.msra.mxu0 0
          %1202 = vmatprep.subr.bf16.mxu0 0
          %1203 = vmatpush1.bf16.msra.mxu0 0
          %1204 = vmatprep.subr.bf16.mxu0 0
          %1205 = vmatpush1.bf16.msra.mxu0 0
          %1206 = vmatprep.subr.bf16.mxu0 0
          %1207 = vmatpush1.bf16.msra.mxu0 0
          %1208 = vmatprep.subr.bf16.mxu0 0
          %1209 = vmatpush1.bf16.msra.mxu0 0
          %1210 = vmatprep.subr.bf16.mxu0 0
          %1211 = vmatpush1.bf16.msra.mxu0 0
          %1212 = vmatprep.subr.bf16.mxu0 0
          %1213 = vmatpush1.bf16.msra.mxu0 0
          %1214 = vmatprep.subr.bf16.mxu0 0
          %1215 = vmatpush1.bf16.msra.mxu0 0
          %1216 = vmatprep.subr.bf16.mxu0 0
          %1217 = vmatpush1.bf16.msra.mxu0 0
          %1218 = vmatprep.subr.bf16.mxu0 0
          %1219 = vmatpush1.bf16.msra.mxu0 0
          %1220 = vmatprep.subr.bf16.mxu0 0
          %1221 = vmatpush1.bf16.msra.mxu0 0
          %1222 = vmatprep.subr.bf16.mxu0 0
          %1223 = vmatpush1.bf16.msra.mxu0 0
          %1224 = vmatprep.mubr.bf16.mxu0 0
          %1225 = vmatmul.mubr.bf16.gmra.mrb[0].mxu0 %v1187
          %v1226 = vpop.f32.mrb[0].mxu0
          %v1227 = vadd.f32 0.0, %v1226
          %v1228 = vpop.f32.mrb[0].mxu0
          %v1229 = vpop.f32.mrb[0].mxu0
          %v1230 = vpop.f32.mrb[0].mxu0
          %1231 = vdwg.mxu0
          %v1232 = vadd.f32 %v1167, %v1227
          %s1233 = scalar_lea.vmem [#allocation4], 24
          %v1234 = vld [vmem:[%s1233] sm:$0xff]
          %v1235 = vrcp.pop %v1234
          %s1236 = scalar_lea.vmem [#allocation5], 24
          %v1237 = vld [vmem:[%s1236] sm:$0xff]
          %1239 = vset.pattern.permute.xlu0 0
          %1240 = vperm.xlu0 %1239, %v1235
          %v1241 = vpop.permute.xlu0 %1240
          %v1243 = vmul.f32 %v1237, %v1241
          %v1244 = vpack.c.bf16 %v1243, %v1243
          %s1245 = scalar_lea.vmem [#allocation12], 12
          %v1246 = vld [vmem:[%s1245] sm:$0xf]
          %v1248 = vsel %vm1078, %v1244, 0
          %v1251 = vsel %vm1082, %v1246, 0
          %1253 = vmatprep.subr.bf16.mxu0 0
          %1254 = vmatpush1.bf16.msra.mxu0 %v1251
          %1255 = vmatprep.subr.bf16.mxu0 0
          %1256 = vmatpush1.bf16.msra.mxu0 0
          %1257 = vmatprep.subr.bf16.mxu0 0
          %1258 = vmatpush1.bf16.msra.mxu0 0
          %1259 = vmatprep.subr.bf16.mxu0 0
          %1260 = vmatpush1.bf16.msra.mxu0 0
          %1261 = vmatprep.subr.bf16.mxu0 0
          %1262 = vmatpush1.bf16.msra.mxu0 0
          %1263 = vmatprep.subr.bf16.mxu0 0
          %1264 = vmatpush1.bf16.msra.mxu0 0
          %1265 = vmatprep.subr.bf16.mxu0 0
          %1266 = vmatpush1.bf16.msra.mxu0 0
          %1267 = vmatprep.subr.bf16.mxu0 0
          %1268 = vmatpush1.bf16.msra.mxu0 0
          %1269 = vmatprep.subr.bf16.mxu0 0
          %1270 = vmatpush1.bf16.msra.mxu0 0
          %1271 = vmatprep.subr.bf16.mxu0 0
          %1272 = vmatpush1.bf16.msra.mxu0 0
          %1273 = vmatprep.subr.bf16.mxu0 0
          %1274 = vmatpush1.bf16.msra.mxu0 0
          %1275 = vmatprep.subr.bf16.mxu0 0
          %1276 = vmatpush1.bf16.msra.mxu0 0
          %1277 = vmatprep.subr.bf16.mxu0 0
          %1278 = vmatpush1.bf16.msra.mxu0 0
          %1279 = vmatprep.subr.bf16.mxu0 0
          %1280 = vmatpush1.bf16.msra.mxu0 0
          %1281 = vmatprep.subr.bf16.mxu0 0
          %1282 = vmatpush1.bf16.msra.mxu0 0
          %1283 = vmatprep.subr.bf16.mxu0 0
          %1284 = vmatpush1.bf16.msra.mxu0 0
          %1285 = vmatprep.mubr.bf16.mxu0 0
          %1286 = vmatmul.mubr.bf16.gmra.mrb[0].mxu0 %v1248
          %v1287 = vpop.f32.mrb[0].mxu0
          %v1288 = vadd.f32 0.0, %v1287
          %v1289 = vpop.f32.mrb[0].mxu0
          %v1290 = vpop.f32.mrb[0].mxu0
          %v1291 = vpop.f32.mrb[0].mxu0
          %1292 = vdwg.mxu0
          %v1293 = vadd.f32 %v1232, %v1288
          %v1294 = vld [vmem:[%s4] sm:$0x1]
          %v1296 = vlaneseq
          %v1297 = vshrl.u32 %v1296, 7
          %v1298 = vsub.s32 0, %v1297
          %v1299 = vrot.slane %v1294, %v1298
          %v1301 = vadd.f32 %v1293, %v1299
          %vm1302 = vcmask 261120
          %1303 = vst.msk [vmem:[%s332] sm:$0xff] %vm1302, %v1301
        $region68: #{tpu_custom_call.1} parent=39 // pred_fallthru
          _
        %s1304 = sand.u32 %s174, 1
        %s1305 = scalar_lea.sflag [#allocation8], %s1304
        %s1306 = sand.u32 %s174, 1
        %s1307 = smul.addr %s1306, 8
        %s1308 = scalar_lea.vmem [#allocation14], %s1307
        // Predicated region
        $region69: #{tpu_custom_call.1} parent=39 // pred_check
          %p1309 = pneg %p184
        $region70: #{tpu_custom_call.1} parent=39 // pred_check_branch
          %1311 = sbr.rel (%p1309) target = $region72
        $region71: #{tpu_custom_call.1} parent=39 // pred_region
          %s1313 = ssub.s32 128, 128
          %1314 = vsyncadd %s1305, %s1313
          %s1315 = sadd.s32 %s32, %s31
          %s1316 = smul.addr %s1315, 128
          %s1317 = scalar_lea.hbm %s5, %s1316
          %s1319 = sshll.u32 %s1308, 4
          %s1320 = int_to_ptr.vmem [resolvable:$true] %s1319
          %1322 = dma.vmem_to_hbm [thread:$0]  %s1320, 128, %s1317, %s1305
        $region72: #{tpu_custom_call.1} parent=39 // pred_fallthru
          _
      $region40: #{tpu_custom_call.1} parent=5 // pred_fallthru
        _
      %p1323 = scmp.le.s32.totalorder 2, %s21
      // Predicated region
      $region73: #{tpu_custom_call.1} parent=5 // pred_check
        %p1324 = pneg %p1323
      $region74: #{tpu_custom_call.1} parent=5 // pred_check_branch
        %1326 = sbr.rel (%p1324) target = $region76
      $region75: #{tpu_custom_call.1} parent=5 // pred_region
        %s1327 = ssub.s32 %s21, 2
        // Predicated region
        $region77: #{tpu_custom_call.1} parent=75 // pred_check
          %p1328 = pneg %p190
        $region78: #{tpu_custom_call.1} parent=75 // pred_check_branch
          %1330 = sbr.rel (%p1328) target = $region80
        $region79: #{tpu_custom_call.1} parent=75 // pred_region
          %s1331 = sand.u32 %s175, 1
          %s1332 = scalar_lea.sflag [#allocation8], %s1331
          %s1333 = sand.u32 %s175, 1
          %s1334 = smul.addr %s1333, 8
          %s1335 = scalar_lea.vmem [#allocation14], %s1334
          %1336 = dma.done %s1332, 128
        $region80: #{tpu_custom_call.1} parent=75 // pred_fallthru
          _
      $region76: #{tpu_custom_call.1} parent=5 // pred_fallthru
        _
    $region6: #{tpu_custom_call.1} parent=1 // loop_footer
      %s25 = sadd.s32 1, %s21
    $region7: #{tpu_custom_call.1} parent=1 // loop_footer_branch
      %20 = sbr.rel target = $region3
    $region8: #{tpu_custom_call.1} parent=1 // loop_exit
      _
    %1337 = vsyncpa [#allocation7], 1
    %s1338 = scalar_lea.sflag [#allocation7], 1
    %1339 = vsyncpa %s1338, 1
    %1340 = vsyncpa [#allocation10], 1
    %s1341 = scalar_lea.sflag [#allocation10], 1
    %1342 = vsyncpa %s1341, 1
    %1343 = vsyncpa [#allocation13], 1
    %1344 = vsyncpa [#allocation8], 1
    %s1345 = scalar_lea.sflag [#allocation8], 1
    %1346 = vsyncpa %s1345, 1

</llo_original>
